<compile_context>
chip_gen: v6e
topology: v6e:2x2x1
jax: 0.10.0
libtpu: 0.0.40
codegen_flags: <defaults>
</compile_context>

<pallas_src>
import numpy as np
import jax
import jax.numpy as jnp
from jax import lax
from jax.experimental import pallas as pl
from jax.experimental.pallas import tpu as pltpu

VOCAB_SIZES = (2, 9, 2, 21421, 2, 3, 3, 3)   # nn.Embedding sizes in the module
NUM_FEATURES = len(VOCAB_SIZES)              # 8
EMB_DIM = 128
NUM_CLASSES = 3
BIG_FEAT = 3                                 # the 21421-row embedding
SMALL_FEATS = (0, 1, 2, 4, 5, 6, 7)          # features served from the small table
SMALL_VOCABS = tuple(VOCAB_SIZES[f] for f in SMALL_FEATS)

_off, _acc = [], 0
for _v in SMALL_VOCABS:
    _off.append(_acc)
    _acc += _v
SMALL_OFFSETS = tuple(_off)                  # row offsets inside the small table
SMALL_ROWS = _acc                            # 24
BIG_ROWS = VOCAB_SIZES[BIG_FEAT]             # 21421

LANES = 128
BIG_ROWS_2D = (BIG_ROWS + LANES - 1) // LANES    # 168 (multiple of 8)
TILE_B = 128                                 # examples per grid step (128 also ideal on v5e;
                                             # raise to 256 on v6e/v7x for very large batches,
                                             # keeping >=2 grid steps so both v7x TCs engage)
NEG_INF = -1e30

# Original-feature id owning each small-table row (static metadata).
_feat_of = np.zeros((SMALL_ROWS,), np.int32)
for _k, _f in enumerate(SMALL_FEATS):
    _feat_of[SMALL_OFFSETS[_k]:SMALL_OFFSETS[_k] + SMALL_VOCABS[_k]] = _f
FEAT_OF_SMALL_ROW = tuple(int(v) for v in _feat_of)


def _classification_kernel(idx_ref, csmall_ref, zbig_ref, w2big_ref, b2_ref, out_ref):
    """One tile of TILE_B examples.

    idx_ref    : VMEM (TILE_B, 8)  int32 : [7 offset-adjusted small indices, big row index]
    csmall_ref : VMEM (24, 128)    f32   : relu(w1.e+b1) * w2 row, per small-table row
    zbig_ref   : VMEM (168, 128)   f32   : relu(w1.e+b1) per big-table row, lane-dense layout
    w2big_ref  : VMEM (1, 128)     f32   : w2[:, 3] zero-padded to 128 lanes
    b2_ref     : VMEM (1, 128)     f32   : b2 in lanes [0,3), -1e30 elsewhere
    out_ref    : VMEM (TILE_B,128) f32   : softmax probs in lanes [0,3), zeros elsewhere
    """
    idx = idx_ref[...]                                        # (TB, 8) int32
    n_small = len(SMALL_FEATS)
    small_idx = idx[:, :n_small]                              # (TB, 7)
    big_idx = idx[:, n_small:n_small + 1]                     # (TB, 1)

    # --- 7 small features: one fused multi-hot x (24,128) MXU matmul ------------
    iota_small = lax.broadcasted_iota(jnp.int32, (TILE_B, SMALL_ROWS), 1)
    multi_hot = jnp.zeros((TILE_B, SMALL_ROWS), jnp.float32)
    for k in range(n_small):                                  # disjoint ranges -> sum of one-hots
        multi_hot += (iota_small == small_idx[:, k:k + 1]).astype(jnp.float32)
    logits = jnp.dot(multi_hot, csmall_ref[...],
                     preferred_element_type=jnp.float32)      # (TB, 128); lanes>=3 are 0

    # --- big feature: two-stage one-hot gather of its folded scalar -------------
    hi = jnp.right_shift(big_idx, 7)                          # row in the (168,128) layout
    lo = jnp.bitwise_and(big_idx, LANES - 1)                  # lane in that row
    row_hot = (lax.broadcasted_iota(jnp.int32, (TILE_B, BIG_ROWS_2D), 1)
               == hi).astype(jnp.float32)                     # (TB, 168)
    sel = jnp.dot(row_hot, zbig_ref[...],
                  preferred_element_type=jnp.float32)         # (TB, 128) chunk per example
    lane_hot = (lax.broadcasted_iota(jnp.int32, (TILE_B, LANES), 1)
                == lo).astype(jnp.float32)                    # (TB, 128)
    z_big = jnp.sum(sel * lane_hot, axis=-1, keepdims=True)   # (TB, 1)

    logits = logits + z_big * w2big_ref[...] + b2_ref[...]    # lanes>=3 pinned at -1e30

    # --- softmax over the lane-dense (padded) class axis -------------------------
    m = jnp.max(logits, axis=-1, keepdims=True)
    e = jnp.exp(logits - m)                                   # padded lanes -> exactly 0
    out_ref[...] = e / jnp.sum(e, axis=-1, keepdims=True)


@jax.jit
def classification_forward_batched(x, emb_small, emb_big, w1, b1, w2, b2):
    """x: (B, 8) int per-feature indices -> (B, 3) f32 class probabilities."""
    x = x.astype(jnp.int32)
    B = x.shape[0]
    pad = (-B) % TILE_B
    if pad:
        x = jnp.concatenate([x, jnp.zeros((pad, NUM_FEATURES), jnp.int32)], axis=0)
    Bp = x.shape[0]

    # Index preprocessing: offset-adjusted small indices + big row index, one int32 block.
    small_idx = x[:, jnp.asarray(SMALL_FEATS)] + jnp.asarray(SMALL_OFFSETS, jnp.int32)
    prep_idx = jnp.concatenate([small_idx, x[:, BIG_FEAT:BIG_FEAT + 1]], axis=1)   # (Bp, 8)

    # Fold linear1 (+ReLU) into the tables: z_row = relu(w1 . emb_row + b1).
    # (Inference-only fold: recompute after any weight update.)
    w1v = w1.reshape(-1).astype(jnp.float32)                       # (128,)
    b1s = b1.reshape(-1)[0].astype(jnp.float32)
    zfold_small = jax.nn.relu(emb_small.astype(jnp.float32) @ w1v + b1s)   # (24,)
    zfold_big = jax.nn.relu(emb_big.astype(jnp.float32) @ w1v + b1s)       # (21421,)
    zfold_big2d = jnp.pad(zfold_big, (0, BIG_ROWS_2D * LANES - BIG_ROWS)
                          ).reshape(BIG_ROWS_2D, LANES)                    # (168, 128)

    # Fold linear2 over the small rows; lane-pad everything to 128 for dense stores.
    w2pad = jnp.zeros((NUM_FEATURES, LANES), jnp.float32).at[:, :NUM_CLASSES].set(
        jnp.transpose(w2).astype(jnp.float32))                             # (8, 128)
    c_small = zfold_small[:, None] * w2pad[jnp.asarray(FEAT_OF_SMALL_ROW)]  # (24, 128)
    w2big_row = w2pad[BIG_FEAT:BIG_FEAT + 1]                                # (1, 128)
    b2pad = jnp.full((1, LANES), NEG_INF, jnp.float32).at[0, :NUM_CLASSES].set(
        b2.astype(jnp.float32))                                             # (1, 128)

    grid_spec = pltpu.PrefetchScalarGridSpec(
        num_scalar_prefetch=0,
        grid=(Bp // TILE_B,),
        in_specs=[
            pl.BlockSpec((TILE_B, NUM_FEATURES), lambda i: (i, 0)),     # indices (per tile)
            pl.BlockSpec((SMALL_ROWS, LANES), lambda i: (0, 0)),        # folded small table
            pl.BlockSpec((BIG_ROWS_2D, LANES), lambda i: (0, 0)),       # folded big table (84 KB)
            pl.BlockSpec((1, LANES), lambda i: (0, 0)),                 # w2 row of big feature
            pl.BlockSpec((1, LANES), lambda i: (0, 0)),                 # padded b2
        ],
        out_specs=pl.BlockSpec((TILE_B, LANES), lambda i: (i, 0)),      # lane-dense output
    )

    out = pl.pallas_call(
        _classification_kernel,
        out_shape=jax.ShapeDtypeStruct((Bp, LANES), jnp.float32),
        grid_spec=grid_spec,
        compiler_params=pltpu.CompilerParams(dimension_semantics=("parallel",)),
    )(prep_idx, c_small, zfold_big2d, w2big_row, b2pad)

    return out[:B, :NUM_CLASSES]


def classification_forward(x, emb_small, emb_big, w1, b1, w2, b2):
    """x: (8,) ints (one per categorical feature) -> (3,) probabilities."""
    return classification_forward_batched(
        x.reshape(1, NUM_FEATURES), emb_small, emb_big, w1, b1, w2, b2)[0]


def init_params(key):
    """Deterministic synthetic parameters matching the module's shapes/inits."""
    k_small, k_big, k_w1, k_b1, k_w2, k_b2 = jax.random.split(key, 6)
    emb_small = jax.random.uniform(k_small, (SMALL_ROWS, EMB_DIM), jnp.float32, -0.1, 0.1)
    emb_big = jax.random.uniform(k_big, (BIG_ROWS, EMB_DIM), jnp.float32, -0.1, 0.1)
    std1 = (2.0 / (EMB_DIM + 1)) ** 0.5
    w1 = jax.random.normal(k_w1, (1, EMB_DIM), jnp.float32) * std1
    bound1 = 1.0 / (EMB_DIM ** 0.5)
    b1 = jax.random.uniform(k_b1, (1,), jnp.float32, -bound1, bound1)
    std2 = (2.0 / (NUM_FEATURES + NUM_CLASSES)) ** 0.5
    w2 = jax.random.normal(k_w2, (NUM_CLASSES, NUM_FEATURES), jnp.float32) * std2
    bound2 = 1.0 / (NUM_FEATURES ** 0.5)
    b2 = jax.random.uniform(k_b2, (NUM_CLASSES,), jnp.float32, -bound2, bound2)
    return emb_small, emb_big, w1, b1, w2, b2


def reference_forward(x, emb_small, emb_big, w1, b1, w2, b2):
    """Pure-JAX single-example reference reproducing the PyTorch forward."""
    x = x.astype(jnp.int32)
    small = emb_small[x[jnp.asarray(SMALL_FEATS)] + jnp.asarray(SMALL_OFFSETS, jnp.int32)]
    big = emb_big[x[BIG_FEAT]][None, :]
    E = jnp.concatenate([small[:3], big, small[3:]], axis=0)      # original feature order
    z = jax.nn.relu(jnp.sum(E * w1[0], axis=-1) + b1[0])          # (8,)
    logits = jnp.sum(z[None, :] * w2, axis=-1) + b2               # (3,)
    return jax.nn.softmax(logits, axis=-1)


# TODO(synk): training helpers (cal_loss / sdg_step / train_step) are not ported;
# only the forward pass is implemented as a Pallas kernel (the linear1/linear2
# fold must be recomputed after every optimizer step if training is added).

if __name__ == "__main__":
    key = jax.random.PRNGKey(0)
    k_param, k_x = jax.random.split(key)
    params = init_params(k_param)

    B = 16
    maxes = jnp.asarray(VOCAB_SIZES, jnp.int32)
    x = jax.random.randint(k_x, (B, NUM_FEATURES), 0, 1_000_000, jnp.int32) % maxes

    out = classification_forward_batched(x, *params)
    out = jax.block_until_ready(out)

    ref = jax.vmap(lambda xi: reference_forward(xi, *params))(x)
    assert out.shape == (B, NUM_CLASSES)
    assert jnp.allclose(out, ref, atol=1e-5, rtol=1e-5), (out, ref)
    assert jnp.allclose(jnp.sum(out, axis=-1), 1.0, atol=1e-5)

    # single-example path (matches the PyTorch module's forward signature)
    out1 = jax.block_until_ready(classification_forward(x[0], *params))
    assert out1.shape == (NUM_CLASSES,)
    assert jnp.allclose(out1, ref[0], atol=1e-5, rtol=1e-5)

    print("KERNEL_OK")
</pallas_src>

<mosaic_0001>
module attributes {stable_mosaic.version = 11 : i64} {
  func.func @_classification_kernel(%arg0: i32, %arg1: memref<128x8xi32, #tpu.memory_space<vmem>>, %arg2: memref<24x128xf32, #tpu.memory_space<vmem>>, %arg3: memref<168x128xf32, #tpu.memory_space<vmem>>, %arg4: memref<1x128xf32, #tpu.memory_space<vmem>>, %arg5: memref<1x128xf32, #tpu.memory_space<vmem>>, %arg6: memref<128x128xf32, #tpu.memory_space<vmem>>) attributes {dimension_semantics = [#tpu.dimension_semantics<parallel>], iteration_bounds = array<i64: 1>, scalar_prefetch = 0 : i64, scratch_operands = 0 : i64, tpu.core_type = #tpu.core_type<tc>, window_params = [{transform_indices = @transform_0, window_bounds = array<i64: 128, 8>}, {pipeline_mode = #tpu.pipeline_mode<synchronous>, transform_indices = @transform_1, window_bounds = array<i64: 24, 128>}, {pipeline_mode = #tpu.pipeline_mode<synchronous>, transform_indices = @transform_2, window_bounds = array<i64: 168, 128>}, {pipeline_mode = #tpu.pipeline_mode<synchronous>, transform_indices = @transform_3, window_bounds = array<i64: 1, 128>}, {pipeline_mode = #tpu.pipeline_mode<synchronous>, transform_indices = @transform_4, window_bounds = array<i64: 1, 128>}, {transform_indices = @transform_5, window_bounds = array<i64: 128, 128>}]} {
    %c0 = arith.constant 0 : index
    %c0_0 = arith.constant 0 : index
    %0 = vector.load %arg1[%c0, %c0_0] : memref<128x8xi32, #tpu.memory_space<vmem>>, vector<128x8xi32>
    %1 = vector.extract_strided_slice %0 {offsets = [0, 0], sizes = [128, 7], strides = [1, 1]} : vector<128x8xi32> to vector<128x7xi32>
    %2 = vector.extract_strided_slice %0 {offsets = [0, 7], sizes = [128, 1], strides = [1, 1]} : vector<128x8xi32> to vector<128x1xi32>
    %3 = tpu.iota {dimensions = array<i32: 1>} : vector<128x24xi32>
    %cst = arith.constant 0.000000e+00 : f32
    %4 = vector.broadcast %cst : f32 to vector<128x24xf32>
    %5 = vector.extract_strided_slice %1 {offsets = [0, 0], sizes = [128, 1], strides = [1, 1]} : vector<128x7xi32> to vector<128x1xi32>
    %6 = vector.broadcast %5 : vector<128x1xi32> to vector<128x24xi32>
    %7 = arith.cmpi eq, %3, %6 : vector<128x24xi32>
    %8 = arith.extui %7 : vector<128x24xi1> to vector<128x24xi32>
    %9 = arith.sitofp %8 : vector<128x24xi32> to vector<128x24xf32>
    %10 = arith.addf %4, %9 : vector<128x24xf32>
    %11 = vector.extract_strided_slice %1 {offsets = [0, 1], sizes = [128, 1], strides = [1, 1]} : vector<128x7xi32> to vector<128x1xi32>
    %12 = vector.broadcast %11 : vector<128x1xi32> to vector<128x24xi32>
    %13 = arith.cmpi eq, %3, %12 : vector<128x24xi32>
    %14 = arith.extui %13 : vector<128x24xi1> to vector<128x24xi32>
    %15 = arith.sitofp %14 : vector<128x24xi32> to vector<128x24xf32>
    %16 = arith.addf %10, %15 : vector<128x24xf32>
    %17 = vector.extract_strided_slice %1 {offsets = [0, 2], sizes = [128, 1], strides = [1, 1]} : vector<128x7xi32> to vector<128x1xi32>
    %18 = vector.broadcast %17 : vector<128x1xi32> to vector<128x24xi32>
    %19 = arith.cmpi eq, %3, %18 : vector<128x24xi32>
    %20 = arith.extui %19 : vector<128x24xi1> to vector<128x24xi32>
    %21 = arith.sitofp %20 : vector<128x24xi32> to vector<128x24xf32>
    %22 = arith.addf %16, %21 : vector<128x24xf32>
    %23 = vector.extract_strided_slice %1 {offsets = [0, 3], sizes = [128, 1], strides = [1, 1]} : vector<128x7xi32> to vector<128x1xi32>
    %24 = vector.broadcast %23 : vector<128x1xi32> to vector<128x24xi32>
    %25 = arith.cmpi eq, %3, %24 : vector<128x24xi32>
    %26 = arith.extui %25 : vector<128x24xi1> to vector<128x24xi32>
    %27 = arith.sitofp %26 : vector<128x24xi32> to vector<128x24xf32>
    %28 = arith.addf %22, %27 : vector<128x24xf32>
    %29 = vector.extract_strided_slice %1 {offsets = [0, 4], sizes = [128, 1], strides = [1, 1]} : vector<128x7xi32> to vector<128x1xi32>
    %30 = vector.broadcast %29 : vector<128x1xi32> to vector<128x24xi32>
    %31 = arith.cmpi eq, %3, %30 : vector<128x24xi32>
    %32 = arith.extui %31 : vector<128x24xi1> to vector<128x24xi32>
    %33 = arith.sitofp %32 : vector<128x24xi32> to vector<128x24xf32>
    %34 = arith.addf %28, %33 : vector<128x24xf32>
    %35 = vector.extract_strided_slice %1 {offsets = [0, 5], sizes = [128, 1], strides = [1, 1]} : vector<128x7xi32> to vector<128x1xi32>
    %36 = vector.broadcast %35 : vector<128x1xi32> to vector<128x24xi32>
    %37 = arith.cmpi eq, %3, %36 : vector<128x24xi32>
    %38 = arith.extui %37 : vector<128x24xi1> to vector<128x24xi32>
    %39 = arith.sitofp %38 : vector<128x24xi32> to vector<128x24xf32>
    %40 = arith.addf %34, %39 : vector<128x24xf32>
    %41 = vector.extract_strided_slice %1 {offsets = [0, 6], sizes = [128, 1], strides = [1, 1]} : vector<128x7xi32> to vector<128x1xi32>
    %42 = vector.broadcast %41 : vector<128x1xi32> to vector<128x24xi32>
    %43 = arith.cmpi eq, %3, %42 : vector<128x24xi32>
    %44 = arith.extui %43 : vector<128x24xi1> to vector<128x24xi32>
    %45 = arith.sitofp %44 : vector<128x24xi32> to vector<128x24xf32>
    %46 = arith.addf %40, %45 : vector<128x24xf32>
    %c0_1 = arith.constant 0 : index
    %c0_2 = arith.constant 0 : index
    %47 = vector.load %arg2[%c0_1, %c0_2] : memref<24x128xf32, #tpu.memory_space<vmem>>, vector<24x128xf32>
    %cst_3 = arith.constant dense<0.000000e+00> : vector<128x128xf32>
    %48 = tpu.matmul %46, %47, %cst_3 {dimension_numbers = #tpu.dot_dimension_numbers<[1], [0], [0], [1], [0, 0, 1, 1], [], []>} : vector<128x24xf32>, vector<24x128xf32>, vector<128x128xf32> -> vector<128x128xf32>
    %c7_i32 = arith.constant 7 : i32
    %49 = vector.broadcast %c7_i32 : i32 to vector<128x1xi32>
    %50 = arith.shrsi %2, %49 : vector<128x1xi32>
    %c127_i32 = arith.constant 127 : i32
    %51 = vector.broadcast %c127_i32 : i32 to vector<128x1xi32>
    %52 = arith.andi %2, %51 : vector<128x1xi32>
    %53 = tpu.iota {dimensions = array<i32: 1>} : vector<128x168xi32>
    %54 = vector.broadcast %50 : vector<128x1xi32> to vector<128x168xi32>
    %55 = arith.cmpi eq, %53, %54 : vector<128x168xi32>
    %56 = arith.extui %55 : vector<128x168xi1> to vector<128x168xi32>
    %57 = arith.sitofp %56 : vector<128x168xi32> to vector<128x168xf32>
    %c0_4 = arith.constant 0 : index
    %c0_5 = arith.constant 0 : index
    %58 = vector.load %arg3[%c0_4, %c0_5] : memref<168x128xf32, #tpu.memory_space<vmem>>, vector<168x128xf32>
    %cst_6 = arith.constant dense<0.000000e+00> : vector<128x128xf32>
    %59 = tpu.matmul %57, %58, %cst_6 {dimension_numbers = #tpu.dot_dimension_numbers<[1], [0], [0], [1], [0, 0, 1, 1], [], []>} : vector<128x168xf32>, vector<168x128xf32>, vector<128x128xf32> -> vector<128x128xf32>
    %60 = tpu.iota {dimensions = array<i32: 1>} : vector<128x128xi32>
    %61 = vector.broadcast %52 : vector<128x1xi32> to vector<128x128xi32>
    %62 = arith.cmpi eq, %60, %61 : vector<128x128xi32>
    %63 = arith.extui %62 : vector<128x128xi1> to vector<128x128xi32>
    %64 = arith.sitofp %63 : vector<128x128xi32> to vector<128x128xf32>
    %65 = arith.mulf %59, %64 : vector<128x128xf32>
    %cst_7 = arith.constant dense<0.000000e+00> : vector<128xf32>
    %66 = vector.multi_reduction <add>, %65, %cst_7 [1] : vector<128x128xf32> to vector<128xf32>
    %67 = vector.shape_cast %66 : vector<128xf32> to vector<128x1xf32>
    %c0_8 = arith.constant 0 : index
    %c0_9 = arith.constant 0 : index
    %68 = vector.load %arg4[%c0_8, %c0_9] : memref<1x128xf32, #tpu.memory_space<vmem>>, vector<1x128xf32>
    %69 = vector.broadcast %67 : vector<128x1xf32> to vector<128x128xf32>
    %70 = vector.broadcast %68 : vector<1x128xf32> to vector<128x128xf32>
    %71 = arith.mulf %69, %70 : vector<128x128xf32>
    %72 = arith.addf %48, %71 : vector<128x128xf32>
    %c0_10 = arith.constant 0 : index
    %c0_11 = arith.constant 0 : index
    %73 = vector.load %arg5[%c0_10, %c0_11] : memref<1x128xf32, #tpu.memory_space<vmem>>, vector<1x128xf32>
    %74 = vector.broadcast %73 : vector<1x128xf32> to vector<128x128xf32>
    %75 = arith.addf %72, %74 : vector<128x128xf32>
    %cst_12 = arith.constant dense<0xFF800000> : vector<128xf32>
    %76 = vector.multi_reduction <maximumf>, %75, %cst_12 [1] : vector<128x128xf32> to vector<128xf32>
    %77 = vector.shape_cast %76 : vector<128xf32> to vector<128x1xf32>
    %78 = vector.broadcast %77 : vector<128x1xf32> to vector<128x128xf32>
    %79 = arith.subf %75, %78 : vector<128x128xf32>
    %80 = math.exp %79 : vector<128x128xf32>
    %cst_13 = arith.constant dense<0.000000e+00> : vector<128xf32>
    %81 = vector.multi_reduction <add>, %80, %cst_13 [1] : vector<128x128xf32> to vector<128xf32>
    %82 = vector.shape_cast %81 : vector<128xf32> to vector<128x1xf32>
    %83 = vector.broadcast %82 : vector<128x1xf32> to vector<128x128xf32>
    %84 = arith.divf %80, %83 : vector<128x128xf32>
    %c0_14 = arith.constant 0 : index
    %c0_15 = arith.constant 0 : index
    %85 = vector.load %arg6[%c0_14, %c0_15] : memref<128x128xf32, #tpu.memory_space<vmem>>, vector<128x128xf32>
    tpu.vector_store %arg6[%c0_14, %c0_15], %84 {strides = array<i32>} : memref<128x128xf32, #tpu.memory_space<vmem>>, vector<128x128xf32>,
    return
  }
  func.func @transform_0(%arg0: i32) -> (i32, i32) {
    %c0_i32 = arith.constant 0 : i32
    %c0_i32_0 = arith.constant 0 : i32
    return %arg0, %c0_i32 : i32, i32
  }
  func.func @transform_1(%arg0: i32) -> (i32, i32) {
    %c0_i32 = arith.constant 0 : i32
    %c0_i32_0 = arith.constant 0 : i32
    %c0_i32_1 = arith.constant 0 : i32
    return %c0_i32, %c0_i32_0 : i32, i32
  }
  func.func @transform_2(%arg0: i32) -> (i32, i32) {
    %c0_i32 = arith.constant 0 : i32
    %c0_i32_0 = arith.constant 0 : i32
    %c0_i32_1 = arith.constant 0 : i32
    return %c0_i32, %c0_i32_0 : i32, i32
  }
  func.func @transform_3(%arg0: i32) -> (i32, i32) {
    %c0_i32 = arith.constant 0 : i32
    %c0_i32_0 = arith.constant 0 : i32
    %c0_i32_1 = arith.constant 0 : i32
    return %c0_i32, %c0_i32_0 : i32, i32
  }
  func.func @transform_4(%arg0: i32) -> (i32, i32) {
    %c0_i32 = arith.constant 0 : i32
    %c0_i32_0 = arith.constant 0 : i32
    %c0_i32_1 = arith.constant 0 : i32
    return %c0_i32, %c0_i32_0 : i32, i32
  }
  func.func @transform_5(%arg0: i32) -> (i32, i32) {
    %c0_i32 = arith.constant 0 : i32
    %c0_i32_0 = arith.constant 0 : i32
    return %arg0, %c0_i32 : i32, i32
  }
}

</mosaic_0001>

<llo_original>
// kernel: classification_forward_batched.1
$region0: #{classification_forward_batched.1}
  #allocation0 [shape = 'u32[]', space=smem, size = 0x4, offset = 0x4, fixed_abs, tag = 'smem constant byte address 0x4 - core index']
  #allocation1 [shape = 'u32[144,128]{1,0:T(1,128)}', space=vmem, size = 0x12000, scoped, tag = 'internal scratch']
  %s0 = inlined_call_operand.vmem [shape: s32[128,8], index: 0, kind: input, shape index: {}]
  %s1 = inlined_call_operand.vmem [shape: f32[24,128], index: 1, kind: input, shape index: {}]
  %s2 = inlined_call_operand.vmem [shape: f32[168,128], index: 2, kind: input, shape index: {}]
  %s3 = inlined_call_operand.vmem [shape: f32[1,128], index: 3, kind: input, shape index: {}]
  %s4 = inlined_call_operand.vmem [shape: f32[1,128], index: 4, kind: input, shape index: {}]
  %s5 = inlined_call_operand.vmem [shape: f32[128,128], index: 5, kind: output, shape index: {}]
  %s6 = sld [smem:[#allocation0]]
  $region30: #{classification_forward_batched.1} parent=0
    _
  %s8 = ssub.s32 1, %s6
  %s9 = scalar_select 0, %s8, %s6
  // Predicated region
  $region2: #{classification_forward_batched.1} parent=0 // pred_check
    _
  $region3: #{classification_forward_batched.1} parent=0 // pred_check_branch
    %11 = sbr.rel (0) target = $region5
  $region4: #{classification_forward_batched.1} parent=0 // pred_region
    _
  $region5: #{classification_forward_batched.1} parent=0 // pred_fallthru
    _
  // Predicated region
  $region6: #{classification_forward_batched.1} parent=0 // pred_check
    _
  $region7: #{classification_forward_batched.1} parent=0 // pred_check_branch
    %13 = sbr.rel (0) target = $region9
  $region8: #{classification_forward_batched.1} parent=0 // pred_region
    _
  $region9: #{classification_forward_batched.1} parent=0 // pred_fallthru
    _
  // Predicated region
  $region10: #{classification_forward_batched.1} parent=0 // pred_check
    _
  $region11: #{classification_forward_batched.1} parent=0 // pred_check_branch
    %15 = sbr.rel (0) target = $region13
  $region12: #{classification_forward_batched.1} parent=0 // pred_region
    _
  $region13: #{classification_forward_batched.1} parent=0 // pred_fallthru
    _
  // Predicated region
  $region14: #{classification_forward_batched.1} parent=0 // pred_check
    _
  $region15: #{classification_forward_batched.1} parent=0 // pred_check_branch
    %17 = sbr.rel (0) target = $region17
  $region16: #{classification_forward_batched.1} parent=0 // pred_region
    _
  $region17: #{classification_forward_batched.1} parent=0 // pred_fallthru
    _
  // Predicated region
  $region18: #{classification_forward_batched.1} parent=0 // pred_check
    _
  $region19: #{classification_forward_batched.1} parent=0 // pred_check_branch
    %19 = sbr.rel (0) target = $region21
  $region20: #{classification_forward_batched.1} parent=0 // pred_region
    _
  $region21: #{classification_forward_batched.1} parent=0 // pred_fallthru
    _
  %v20 = vld [vmem:[%s0] sm:$0xff]
  %v21 = vld [vmem:[%s0 + $0x8] sm:$0xff]
  %v22 = vld [vmem:[%s0 + $0x10] sm:$0xff]
  %v23 = vld [vmem:[%s0 + $0x18] sm:$0xff]
  %v24 = vld [vmem:[%s0 + $0x20] sm:$0xff]
  %v25 = vld [vmem:[%s0 + $0x28] sm:$0xff]
  %v26 = vld [vmem:[%s0 + $0x30] sm:$0xff]
  %v27 = vld [vmem:[%s0 + $0x38] sm:$0xff]
  %v28 = vld [vmem:[%s0 + $0x40] sm:$0xff]
  %v29 = vld [vmem:[%s0 + $0x48] sm:$0xff]
  %v30 = vld [vmem:[%s0 + $0x50] sm:$0xff]
  %v31 = vld [vmem:[%s0 + $0x58] sm:$0xff]
  %v32 = vld [vmem:[%s0 + $0x60] sm:$0xff]
  %v33 = vld [vmem:[%s0 + $0x68] sm:$0xff]
  %v34 = vld [vmem:[%s0 + $0x70] sm:$0xff]
  %v35 = vld [vmem:[%s0 + $0x78] sm:$0xff]
  %v36 = vlaneseq
  %v37 = vand.u32 %v36, 127
  %38 = vset.pattern.permute.xlu0 0
  %39 = vperm.xlu0 %38, %v20
  %v40 = vpop.permute.xlu0 %39
  %41 = vset.pattern.permute.xlu0 0
  %42 = vperm.xlu0 %41, %v21
  %v43 = vpop.permute.xlu0 %42
  %44 = vset.pattern.permute.xlu0 0
  %45 = vperm.xlu0 %44, %v22
  %v46 = vpop.permute.xlu0 %45
  %47 = vset.pattern.permute.xlu0 0
  %48 = vperm.xlu0 %47, %v23
  %v49 = vpop.permute.xlu0 %48
  %50 = vset.pattern.permute.xlu0 0
  %51 = vperm.xlu0 %50, %v24
  %v52 = vpop.permute.xlu0 %51
  %53 = vset.pattern.permute.xlu0 0
  %54 = vperm.xlu0 %53, %v25
  %v55 = vpop.permute.xlu0 %54
  %56 = vset.pattern.permute.xlu0 0
  %57 = vperm.xlu0 %56, %v26
  %v58 = vpop.permute.xlu0 %57
  %59 = vset.pattern.permute.xlu0 0
  %60 = vperm.xlu0 %59, %v27
  %v61 = vpop.permute.xlu0 %60
  %62 = vset.pattern.permute.xlu0 0
  %63 = vperm.xlu0 %62, %v28
  %v64 = vpop.permute.xlu0 %63
  %65 = vset.pattern.permute.xlu0 0
  %66 = vperm.xlu0 %65, %v29
  %v67 = vpop.permute.xlu0 %66
  %68 = vset.pattern.permute.xlu0 0
  %69 = vperm.xlu0 %68, %v30
  %v70 = vpop.permute.xlu0 %69
  %71 = vset.pattern.permute.xlu0 0
  %72 = vperm.xlu0 %71, %v31
  %v73 = vpop.permute.xlu0 %72
  %74 = vset.pattern.permute.xlu0 0
  %75 = vperm.xlu0 %74, %v32
  %v76 = vpop.permute.xlu0 %75
  %77 = vset.pattern.permute.xlu0 0
  %78 = vperm.xlu0 %77, %v33
  %v79 = vpop.permute.xlu0 %78
  %80 = vset.pattern.permute.xlu0 0
  %81 = vperm.xlu0 %80, %v34
  %v82 = vpop.permute.xlu0 %81
  %83 = vset.pattern.permute.xlu0 0
  %84 = vperm.xlu0 %83, %v35
  %v85 = vpop.permute.xlu0 %84
  %vm86 = vcmp.eq.s32.totalorder %v37, %v40
  %vm87 = vcmp.eq.s32.totalorder %v37, %v43
  %vm88 = vcmp.eq.s32.totalorder %v37, %v46
  %vm89 = vcmp.eq.s32.totalorder %v37, %v49
  %vm90 = vcmp.eq.s32.totalorder %v37, %v52
  %vm91 = vcmp.eq.s32.totalorder %v37, %v55
  %vm92 = vcmp.eq.s32.totalorder %v37, %v58
  %vm93 = vcmp.eq.s32.totalorder %v37, %v61
  %vm94 = vcmp.eq.s32.totalorder %v37, %v64
  %vm95 = vcmp.eq.s32.totalorder %v37, %v67
  %vm96 = vcmp.eq.s32.totalorder %v37, %v70
  %vm97 = vcmp.eq.s32.totalorder %v37, %v73
  %vm98 = vcmp.eq.s32.totalorder %v37, %v76
  %vm99 = vcmp.eq.s32.totalorder %v37, %v79
  %vm100 = vcmp.eq.s32.totalorder %v37, %v82
  %vm101 = vcmp.eq.s32.totalorder %v37, %v85
  %v102 = vsel %vm86, 1, 0
  %v103 = vsel %vm87, 1, 0
  %v104 = vsel %vm88, 1, 0
  %v105 = vsel %vm89, 1, 0
  %v106 = vsel %vm90, 1, 0
  %v107 = vsel %vm91, 1, 0
  %v108 = vsel %vm92, 1, 0
  %v109 = vsel %vm93, 1, 0
  %v110 = vsel %vm94, 1, 0
  %v111 = vsel %vm95, 1, 0
  %v112 = vsel %vm96, 1, 0
  %v113 = vsel %vm97, 1, 0
  %v114 = vsel %vm98, 1, 0
  %v115 = vsel %vm99, 1, 0
  %v116 = vsel %vm100, 1, 0
  %v117 = vsel %vm101, 1, 0
  %v118 = vcvt.s32.f32 %v102
  %v119 = vcvt.s32.f32 %v103
  %v120 = vcvt.s32.f32 %v104
  %v121 = vcvt.s32.f32 %v105
  %v122 = vcvt.s32.f32 %v106
  %v123 = vcvt.s32.f32 %v107
  %v124 = vcvt.s32.f32 %v108
  %v125 = vcvt.s32.f32 %v109
  %v126 = vcvt.s32.f32 %v110
  %v127 = vcvt.s32.f32 %v111
  %v128 = vcvt.s32.f32 %v112
  %v129 = vcvt.s32.f32 %v113
  %v130 = vcvt.s32.f32 %v114
  %v131 = vcvt.s32.f32 %v115
  %v132 = vcvt.s32.f32 %v116
  %v133 = vcvt.s32.f32 %v117
  %v134 = vadd.f32 %v118, 0.0
  %v135 = vadd.f32 %v119, 0.0
  %v136 = vadd.f32 %v120, 0.0
  %v137 = vadd.f32 %v121, 0.0
  %v138 = vadd.f32 %v122, 0.0
  %v139 = vadd.f32 %v123, 0.0
  %v140 = vadd.f32 %v124, 0.0
  %v141 = vadd.f32 %v125, 0.0
  %v142 = vadd.f32 %v126, 0.0
  %v143 = vadd.f32 %v127, 0.0
  %v144 = vadd.f32 %v128, 0.0
  %v145 = vadd.f32 %v129, 0.0
  %v146 = vadd.f32 %v130, 0.0
  %v147 = vadd.f32 %v131, 0.0
  %v148 = vadd.f32 %v132, 0.0
  %v149 = vadd.f32 %v133, 0.0
  %150 = vset.pattern.permute.xlu0 1
  %151 = vperm.xlu0 %150, %v20
  %v152 = vpop.permute.xlu0 %151
  %153 = vset.pattern.permute.xlu0 1
  %154 = vperm.xlu0 %153, %v21
  %v155 = vpop.permute.xlu0 %154
  %156 = vset.pattern.permute.xlu0 1
  %157 = vperm.xlu0 %156, %v22
  %v158 = vpop.permute.xlu0 %157
  %159 = vset.pattern.permute.xlu0 1
  %160 = vperm.xlu0 %159, %v23
  %v161 = vpop.permute.xlu0 %160
  %162 = vset.pattern.permute.xlu0 1
  %163 = vperm.xlu0 %162, %v24
  %v164 = vpop.permute.xlu0 %163
  %165 = vset.pattern.permute.xlu0 1
  %166 = vperm.xlu0 %165, %v25
  %v167 = vpop.permute.xlu0 %166
  %168 = vset.pattern.permute.xlu0 1
  %169 = vperm.xlu0 %168, %v26
  %v170 = vpop.permute.xlu0 %169
  %171 = vset.pattern.permute.xlu0 1
  %172 = vperm.xlu0 %171, %v27
  %v173 = vpop.permute.xlu0 %172
  %174 = vset.pattern.permute.xlu0 1
  %175 = vperm.xlu0 %174, %v28
  %v176 = vpop.permute.xlu0 %175
  %177 = vset.pattern.permute.xlu0 1
  %178 = vperm.xlu0 %177, %v29
  %v179 = vpop.permute.xlu0 %178
  %180 = vset.pattern.permute.xlu0 1
  %181 = vperm.xlu0 %180, %v30
  %v182 = vpop.permute.xlu0 %181
  %183 = vset.pattern.permute.xlu0 1
  %184 = vperm.xlu0 %183, %v31
  %v185 = vpop.permute.xlu0 %184
  %186 = vset.pattern.permute.xlu0 1
  %187 = vperm.xlu0 %186, %v32
  %v188 = vpop.permute.xlu0 %187
  %189 = vset.pattern.permute.xlu0 1
  %190 = vperm.xlu0 %189, %v33
  %v191 = vpop.permute.xlu0 %190
  %192 = vset.pattern.permute.xlu0 1
  %193 = vperm.xlu0 %192, %v34
  %v194 = vpop.permute.xlu0 %193
  %195 = vset.pattern.permute.xlu0 1
  %196 = vperm.xlu0 %195, %v35
  %v197 = vpop.permute.xlu0 %196
  %vm198 = vcmp.eq.s32.totalorder %v37, %v152
  %vm199 = vcmp.eq.s32.totalorder %v37, %v155
  %vm200 = vcmp.eq.s32.totalorder %v37, %v158
  %vm201 = vcmp.eq.s32.totalorder %v37, %v161
  %vm202 = vcmp.eq.s32.totalorder %v37, %v164
  %vm203 = vcmp.eq.s32.totalorder %v37, %v167
  %vm204 = vcmp.eq.s32.totalorder %v37, %v170
  %vm205 = vcmp.eq.s32.totalorder %v37, %v173
  %vm206 = vcmp.eq.s32.totalorder %v37, %v176
  %vm207 = vcmp.eq.s32.totalorder %v37, %v179
  %vm208 = vcmp.eq.s32.totalorder %v37, %v182
  %vm209 = vcmp.eq.s32.totalorder %v37, %v185
  %vm210 = vcmp.eq.s32.totalorder %v37, %v188
  %vm211 = vcmp.eq.s32.totalorder %v37, %v191
  %vm212 = vcmp.eq.s32.totalorder %v37, %v194
  %vm213 = vcmp.eq.s32.totalorder %v37, %v197
  %v214 = vsel %vm198, 1, 0
  %v215 = vsel %vm199, 1, 0
  %v216 = vsel %vm200, 1, 0
  %v217 = vsel %vm201, 1, 0
  %v218 = vsel %vm202, 1, 0
  %v219 = vsel %vm203, 1, 0
  %v220 = vsel %vm204, 1, 0
  %v221 = vsel %vm205, 1, 0
  %v222 = vsel %vm206, 1, 0
  %v223 = vsel %vm207, 1, 0
  %v224 = vsel %vm208, 1, 0
  %v225 = vsel %vm209, 1, 0
  %v226 = vsel %vm210, 1, 0
  %v227 = vsel %vm211, 1, 0
  %v228 = vsel %vm212, 1, 0
  %v229 = vsel %vm213, 1, 0
  %v230 = vcvt.s32.f32 %v214
  %v231 = vcvt.s32.f32 %v215
  %v232 = vcvt.s32.f32 %v216
  %v233 = vcvt.s32.f32 %v217
  %v234 = vcvt.s32.f32 %v218
  %v235 = vcvt.s32.f32 %v219
  %v236 = vcvt.s32.f32 %v220
  %v237 = vcvt.s32.f32 %v221
  %v238 = vcvt.s32.f32 %v222
  %v239 = vcvt.s32.f32 %v223
  %v240 = vcvt.s32.f32 %v224
  %v241 = vcvt.s32.f32 %v225
  %v242 = vcvt.s32.f32 %v226
  %v243 = vcvt.s32.f32 %v227
  %v244 = vcvt.s32.f32 %v228
  %v245 = vcvt.s32.f32 %v229
  %v246 = vadd.f32 %v134, %v230
  %v247 = vadd.f32 %v135, %v231
  %v248 = vadd.f32 %v136, %v232
  %v249 = vadd.f32 %v137, %v233
  %v250 = vadd.f32 %v138, %v234
  %v251 = vadd.f32 %v139, %v235
  %v252 = vadd.f32 %v140, %v236
  %v253 = vadd.f32 %v141, %v237
  %v254 = vadd.f32 %v142, %v238
  %v255 = vadd.f32 %v143, %v239
  %v256 = vadd.f32 %v144, %v240
  %v257 = vadd.f32 %v145, %v241
  %v258 = vadd.f32 %v146, %v242
  %v259 = vadd.f32 %v147, %v243
  %v260 = vadd.f32 %v148, %v244
  %v261 = vadd.f32 %v149, %v245
  %262 = vset.pattern.permute.xlu0 2
  %263 = vperm.xlu0 %262, %v20
  %v264 = vpop.permute.xlu0 %263
  %265 = vset.pattern.permute.xlu0 2
  %266 = vperm.xlu0 %265, %v21
  %v267 = vpop.permute.xlu0 %266
  %268 = vset.pattern.permute.xlu0 2
  %269 = vperm.xlu0 %268, %v22
  %v270 = vpop.permute.xlu0 %269
  %271 = vset.pattern.permute.xlu0 2
  %272 = vperm.xlu0 %271, %v23
  %v273 = vpop.permute.xlu0 %272
  %274 = vset.pattern.permute.xlu0 2
  %275 = vperm.xlu0 %274, %v24
  %v276 = vpop.permute.xlu0 %275
  %277 = vset.pattern.permute.xlu0 2
  %278 = vperm.xlu0 %277, %v25
  %v279 = vpop.permute.xlu0 %278
  %280 = vset.pattern.permute.xlu0 2
  %281 = vperm.xlu0 %280, %v26
  %v282 = vpop.permute.xlu0 %281
  %283 = vset.pattern.permute.xlu0 2
  %284 = vperm.xlu0 %283, %v27
  %v285 = vpop.permute.xlu0 %284
  %286 = vset.pattern.permute.xlu0 2
  %287 = vperm.xlu0 %286, %v28
  %v288 = vpop.permute.xlu0 %287
  %289 = vset.pattern.permute.xlu0 2
  %290 = vperm.xlu0 %289, %v29
  %v291 = vpop.permute.xlu0 %290
  %292 = vset.pattern.permute.xlu0 2
  %293 = vperm.xlu0 %292, %v30
  %v294 = vpop.permute.xlu0 %293
  %295 = vset.pattern.permute.xlu0 2
  %296 = vperm.xlu0 %295, %v31
  %v297 = vpop.permute.xlu0 %296
  %298 = vset.pattern.permute.xlu0 2
  %299 = vperm.xlu0 %298, %v32
  %v300 = vpop.permute.xlu0 %299
  %301 = vset.pattern.permute.xlu0 2
  %302 = vperm.xlu0 %301, %v33
  %v303 = vpop.permute.xlu0 %302
  %304 = vset.pattern.permute.xlu0 2
  %305 = vperm.xlu0 %304, %v34
  %v306 = vpop.permute.xlu0 %305
  %307 = vset.pattern.permute.xlu0 2
  %308 = vperm.xlu0 %307, %v35
  %v309 = vpop.permute.xlu0 %308
  %vm310 = vcmp.eq.s32.totalorder %v37, %v264
  %vm311 = vcmp.eq.s32.totalorder %v37, %v267
  %vm312 = vcmp.eq.s32.totalorder %v37, %v270
  %vm313 = vcmp.eq.s32.totalorder %v37, %v273
  %vm314 = vcmp.eq.s32.totalorder %v37, %v276
  %vm315 = vcmp.eq.s32.totalorder %v37, %v279
  %vm316 = vcmp.eq.s32.totalorder %v37, %v282
  %vm317 = vcmp.eq.s32.totalorder %v37, %v285
  %vm318 = vcmp.eq.s32.totalorder %v37, %v288
  %vm319 = vcmp.eq.s32.totalorder %v37, %v291
  %vm320 = vcmp.eq.s32.totalorder %v37, %v294
  %vm321 = vcmp.eq.s32.totalorder %v37, %v297
  %vm322 = vcmp.eq.s32.totalorder %v37, %v300
  %vm323 = vcmp.eq.s32.totalorder %v37, %v303
  %vm324 = vcmp.eq.s32.totalorder %v37, %v306
  %vm325 = vcmp.eq.s32.totalorder %v37, %v309
  %v326 = vsel %vm310, 1, 0
  %v327 = vsel %vm311, 1, 0
  %v328 = vsel %vm312, 1, 0
  %v329 = vsel %vm313, 1, 0
  %v330 = vsel %vm314, 1, 0
  %v331 = vsel %vm315, 1, 0
  %v332 = vsel %vm316, 1, 0
  %v333 = vsel %vm317, 1, 0
  %v334 = vsel %vm318, 1, 0
  %v335 = vsel %vm319, 1, 0
  %v336 = vsel %vm320, 1, 0
  %v337 = vsel %vm321, 1, 0
  %v338 = vsel %vm322, 1, 0
  %v339 = vsel %vm323, 1, 0
  %v340 = vsel %vm324, 1, 0
  %v341 = vsel %vm325, 1, 0
  %v342 = vcvt.s32.f32 %v326
  %v343 = vcvt.s32.f32 %v327
  %v344 = vcvt.s32.f32 %v328
  %v345 = vcvt.s32.f32 %v329
  %v346 = vcvt.s32.f32 %v330
  %v347 = vcvt.s32.f32 %v331
  %v348 = vcvt.s32.f32 %v332
  %v349 = vcvt.s32.f32 %v333
  %v350 = vcvt.s32.f32 %v334
  %v351 = vcvt.s32.f32 %v335
  %v352 = vcvt.s32.f32 %v336
  %v353 = vcvt.s32.f32 %v337
  %v354 = vcvt.s32.f32 %v338
  %v355 = vcvt.s32.f32 %v339
  %v356 = vcvt.s32.f32 %v340
  %v357 = vcvt.s32.f32 %v341
  %v358 = vadd.f32 %v246, %v342
  %v359 = vadd.f32 %v247, %v343
  %v360 = vadd.f32 %v248, %v344
  %v361 = vadd.f32 %v249, %v345
  %v362 = vadd.f32 %v250, %v346
  %v363 = vadd.f32 %v251, %v347
  %v364 = vadd.f32 %v252, %v348
  %v365 = vadd.f32 %v253, %v349
  %v366 = vadd.f32 %v254, %v350
  %v367 = vadd.f32 %v255, %v351
  %v368 = vadd.f32 %v256, %v352
  %v369 = vadd.f32 %v257, %v353
  %v370 = vadd.f32 %v258, %v354
  %v371 = vadd.f32 %v259, %v355
  %v372 = vadd.f32 %v260, %v356
  %v373 = vadd.f32 %v261, %v357
  %374 = vset.pattern.permute.xlu0 3
  %375 = vperm.xlu0 %374, %v20
  %v376 = vpop.permute.xlu0 %375
  %377 = vset.pattern.permute.xlu0 3
  %378 = vperm.xlu0 %377, %v21
  %v379 = vpop.permute.xlu0 %378
  %380 = vset.pattern.permute.xlu0 3
  %381 = vperm.xlu0 %380, %v22
  %v382 = vpop.permute.xlu0 %381
  %383 = vset.pattern.permute.xlu0 3
  %384 = vperm.xlu0 %383, %v23
  %v385 = vpop.permute.xlu0 %384
  %386 = vset.pattern.permute.xlu0 3
  %387 = vperm.xlu0 %386, %v24
  %v388 = vpop.permute.xlu0 %387
  %389 = vset.pattern.permute.xlu0 3
  %390 = vperm.xlu0 %389, %v25
  %v391 = vpop.permute.xlu0 %390
  %392 = vset.pattern.permute.xlu0 3
  %393 = vperm.xlu0 %392, %v26
  %v394 = vpop.permute.xlu0 %393
  %395 = vset.pattern.permute.xlu0 3
  %396 = vperm.xlu0 %395, %v27
  %v397 = vpop.permute.xlu0 %396
  %398 = vset.pattern.permute.xlu0 3
  %399 = vperm.xlu0 %398, %v28
  %v400 = vpop.permute.xlu0 %399
  %401 = vset.pattern.permute.xlu0 3
  %402 = vperm.xlu0 %401, %v29
  %v403 = vpop.permute.xlu0 %402
  %404 = vset.pattern.permute.xlu0 3
  %405 = vperm.xlu0 %404, %v30
  %v406 = vpop.permute.xlu0 %405
  %407 = vset.pattern.permute.xlu0 3
  %408 = vperm.xlu0 %407, %v31
  %v409 = vpop.permute.xlu0 %408
  %410 = vset.pattern.permute.xlu0 3
  %411 = vperm.xlu0 %410, %v32
  %v412 = vpop.permute.xlu0 %411
  %413 = vset.pattern.permute.xlu0 3
  %414 = vperm.xlu0 %413, %v33
  %v415 = vpop.permute.xlu0 %414
  %416 = vset.pattern.permute.xlu0 3
  %417 = vperm.xlu0 %416, %v34
  %v418 = vpop.permute.xlu0 %417
  %419 = vset.pattern.permute.xlu0 3
  %420 = vperm.xlu0 %419, %v35
  %v421 = vpop.permute.xlu0 %420
  %vm422 = vcmp.eq.s32.totalorder %v37, %v376
  %vm423 = vcmp.eq.s32.totalorder %v37, %v379
  %vm424 = vcmp.eq.s32.totalorder %v37, %v382
  %vm425 = vcmp.eq.s32.totalorder %v37, %v385
  %vm426 = vcmp.eq.s32.totalorder %v37, %v388
  %vm427 = vcmp.eq.s32.totalorder %v37, %v391
  %vm428 = vcmp.eq.s32.totalorder %v37, %v394
  %vm429 = vcmp.eq.s32.totalorder %v37, %v397
  %vm430 = vcmp.eq.s32.totalorder %v37, %v400
  %vm431 = vcmp.eq.s32.totalorder %v37, %v403
  %vm432 = vcmp.eq.s32.totalorder %v37, %v406
  %vm433 = vcmp.eq.s32.totalorder %v37, %v409
  %vm434 = vcmp.eq.s32.totalorder %v37, %v412
  %vm435 = vcmp.eq.s32.totalorder %v37, %v415
  %vm436 = vcmp.eq.s32.totalorder %v37, %v418
  %vm437 = vcmp.eq.s32.totalorder %v37, %v421
  %v438 = vsel %vm422, 1, 0
  %v439 = vsel %vm423, 1, 0
  %v440 = vsel %vm424, 1, 0
  %v441 = vsel %vm425, 1, 0
  %v442 = vsel %vm426, 1, 0
  %v443 = vsel %vm427, 1, 0
  %v444 = vsel %vm428, 1, 0
  %v445 = vsel %vm429, 1, 0
  %v446 = vsel %vm430, 1, 0
  %v447 = vsel %vm431, 1, 0
  %v448 = vsel %vm432, 1, 0
  %v449 = vsel %vm433, 1, 0
  %v450 = vsel %vm434, 1, 0
  %v451 = vsel %vm435, 1, 0
  %v452 = vsel %vm436, 1, 0
  %v453 = vsel %vm437, 1, 0
  %v454 = vcvt.s32.f32 %v438
  %v455 = vcvt.s32.f32 %v439
  %v456 = vcvt.s32.f32 %v440
  %v457 = vcvt.s32.f32 %v441
  %v458 = vcvt.s32.f32 %v442
  %v459 = vcvt.s32.f32 %v443
  %v460 = vcvt.s32.f32 %v444
  %v461 = vcvt.s32.f32 %v445
  %v462 = vcvt.s32.f32 %v446
  %v463 = vcvt.s32.f32 %v447
  %v464 = vcvt.s32.f32 %v448
  %v465 = vcvt.s32.f32 %v449
  %v466 = vcvt.s32.f32 %v450
  %v467 = vcvt.s32.f32 %v451
  %v468 = vcvt.s32.f32 %v452
  %v469 = vcvt.s32.f32 %v453
  %v470 = vadd.f32 %v358, %v454
  %v471 = vadd.f32 %v359, %v455
  %v472 = vadd.f32 %v360, %v456
  %v473 = vadd.f32 %v361, %v457
  %v474 = vadd.f32 %v362, %v458
  %v475 = vadd.f32 %v363, %v459
  %v476 = vadd.f32 %v364, %v460
  %v477 = vadd.f32 %v365, %v461
  %v478 = vadd.f32 %v366, %v462
  %v479 = vadd.f32 %v367, %v463
  %v480 = vadd.f32 %v368, %v464
  %v481 = vadd.f32 %v369, %v465
  %v482 = vadd.f32 %v370, %v466
  %v483 = vadd.f32 %v371, %v467
  %v484 = vadd.f32 %v372, %v468
  %v485 = vadd.f32 %v373, %v469
  %486 = vset.pattern.permute.xlu0 4
  %487 = vperm.xlu0 %486, %v20
  %v488 = vpop.permute.xlu0 %487
  %489 = vset.pattern.permute.xlu0 4
  %490 = vperm.xlu0 %489, %v21
  %v491 = vpop.permute.xlu0 %490
  %492 = vset.pattern.permute.xlu0 4
  %493 = vperm.xlu0 %492, %v22
  %v494 = vpop.permute.xlu0 %493
  %495 = vset.pattern.permute.xlu0 4
  %496 = vperm.xlu0 %495, %v23
  %v497 = vpop.permute.xlu0 %496
  %498 = vset.pattern.permute.xlu0 4
  %499 = vperm.xlu0 %498, %v24
  %v500 = vpop.permute.xlu0 %499
  %501 = vset.pattern.permute.xlu0 4
  %502 = vperm.xlu0 %501, %v25
  %v503 = vpop.permute.xlu0 %502
  %504 = vset.pattern.permute.xlu0 4
  %505 = vperm.xlu0 %504, %v26
  %v506 = vpop.permute.xlu0 %505
  %507 = vset.pattern.permute.xlu0 4
  %508 = vperm.xlu0 %507, %v27
  %v509 = vpop.permute.xlu0 %508
  %510 = vset.pattern.permute.xlu0 4
  %511 = vperm.xlu0 %510, %v28
  %v512 = vpop.permute.xlu0 %511
  %513 = vset.pattern.permute.xlu0 4
  %514 = vperm.xlu0 %513, %v29
  %v515 = vpop.permute.xlu0 %514
  %516 = vset.pattern.permute.xlu0 4
  %517 = vperm.xlu0 %516, %v30
  %v518 = vpop.permute.xlu0 %517
  %519 = vset.pattern.permute.xlu0 4
  %520 = vperm.xlu0 %519, %v31
  %v521 = vpop.permute.xlu0 %520
  %522 = vset.pattern.permute.xlu0 4
  %523 = vperm.xlu0 %522, %v32
  %v524 = vpop.permute.xlu0 %523
  %525 = vset.pattern.permute.xlu0 4
  %526 = vperm.xlu0 %525, %v33
  %v527 = vpop.permute.xlu0 %526
  %528 = vset.pattern.permute.xlu0 4
  %529 = vperm.xlu0 %528, %v34
  %v530 = vpop.permute.xlu0 %529
  %531 = vset.pattern.permute.xlu0 4
  %532 = vperm.xlu0 %531, %v35
  %v533 = vpop.permute.xlu0 %532
  %vm534 = vcmp.eq.s32.totalorder %v37, %v488
  %vm535 = vcmp.eq.s32.totalorder %v37, %v491
  %vm536 = vcmp.eq.s32.totalorder %v37, %v494
  %vm537 = vcmp.eq.s32.totalorder %v37, %v497
  %vm538 = vcmp.eq.s32.totalorder %v37, %v500
  %vm539 = vcmp.eq.s32.totalorder %v37, %v503
  %vm540 = vcmp.eq.s32.totalorder %v37, %v506
  %vm541 = vcmp.eq.s32.totalorder %v37, %v509
  %vm542 = vcmp.eq.s32.totalorder %v37, %v512
  %vm543 = vcmp.eq.s32.totalorder %v37, %v515
  %vm544 = vcmp.eq.s32.totalorder %v37, %v518
  %vm545 = vcmp.eq.s32.totalorder %v37, %v521
  %vm546 = vcmp.eq.s32.totalorder %v37, %v524
  %vm547 = vcmp.eq.s32.totalorder %v37, %v527
  %vm548 = vcmp.eq.s32.totalorder %v37, %v530
  %vm549 = vcmp.eq.s32.totalorder %v37, %v533
  %v550 = vsel %vm534, 1, 0
  %v551 = vsel %vm535, 1, 0
  %v552 = vsel %vm536, 1, 0
  %v553 = vsel %vm537, 1, 0
  %v554 = vsel %vm538, 1, 0
  %v555 = vsel %vm539, 1, 0
  %v556 = vsel %vm540, 1, 0
  %v557 = vsel %vm541, 1, 0
  %v558 = vsel %vm542, 1, 0
  %v559 = vsel %vm543, 1, 0
  %v560 = vsel %vm544, 1, 0
  %v561 = vsel %vm545, 1, 0
  %v562 = vsel %vm546, 1, 0
  %v563 = vsel %vm547, 1, 0
  %v564 = vsel %vm548, 1, 0
  %v565 = vsel %vm549, 1, 0
  %v566 = vcvt.s32.f32 %v550
  %v567 = vcvt.s32.f32 %v551
  %v568 = vcvt.s32.f32 %v552
  %v569 = vcvt.s32.f32 %v553
  %v570 = vcvt.s32.f32 %v554
  %v571 = vcvt.s32.f32 %v555
  %v572 = vcvt.s32.f32 %v556
  %v573 = vcvt.s32.f32 %v557
  %v574 = vcvt.s32.f32 %v558
  %v575 = vcvt.s32.f32 %v559
  %v576 = vcvt.s32.f32 %v560
  %v577 = vcvt.s32.f32 %v561
  %v578 = vcvt.s32.f32 %v562
  %v579 = vcvt.s32.f32 %v563
  %v580 = vcvt.s32.f32 %v564
  %v581 = vcvt.s32.f32 %v565
  %v582 = vadd.f32 %v470, %v566
  %v583 = vadd.f32 %v471, %v567
  %v584 = vadd.f32 %v472, %v568
  %v585 = vadd.f32 %v473, %v569
  %v586 = vadd.f32 %v474, %v570
  %v587 = vadd.f32 %v475, %v571
  %v588 = vadd.f32 %v476, %v572
  %v589 = vadd.f32 %v477, %v573
  %v590 = vadd.f32 %v478, %v574
  %v591 = vadd.f32 %v479, %v575
  %v592 = vadd.f32 %v480, %v576
  %v593 = vadd.f32 %v481, %v577
  %v594 = vadd.f32 %v482, %v578
  %v595 = vadd.f32 %v483, %v579
  %v596 = vadd.f32 %v484, %v580
  %v597 = vadd.f32 %v485, %v581
  %598 = vset.pattern.permute.xlu0 5
  %599 = vperm.xlu0 %598, %v20
  %v600 = vpop.permute.xlu0 %599
  %601 = vset.pattern.permute.xlu0 5
  %602 = vperm.xlu0 %601, %v21
  %v603 = vpop.permute.xlu0 %602
  %604 = vset.pattern.permute.xlu0 5
  %605 = vperm.xlu0 %604, %v22
  %v606 = vpop.permute.xlu0 %605
  %607 = vset.pattern.permute.xlu0 5
  %608 = vperm.xlu0 %607, %v23
  %v609 = vpop.permute.xlu0 %608
  %610 = vset.pattern.permute.xlu0 5
  %611 = vperm.xlu0 %610, %v24
  %v612 = vpop.permute.xlu0 %611
  %613 = vset.pattern.permute.xlu0 5
  %614 = vperm.xlu0 %613, %v25
  %v615 = vpop.permute.xlu0 %614
  %616 = vset.pattern.permute.xlu0 5
  %617 = vperm.xlu0 %616, %v26
  %v618 = vpop.permute.xlu0 %617
  %619 = vset.pattern.permute.xlu0 5
  %620 = vperm.xlu0 %619, %v27
  %v621 = vpop.permute.xlu0 %620
  %622 = vset.pattern.permute.xlu0 5
  %623 = vperm.xlu0 %622, %v28
  %v624 = vpop.permute.xlu0 %623
  %625 = vset.pattern.permute.xlu0 5
  %626 = vperm.xlu0 %625, %v29
  %v627 = vpop.permute.xlu0 %626
  %628 = vset.pattern.permute.xlu0 5
  %629 = vperm.xlu0 %628, %v30
  %v630 = vpop.permute.xlu0 %629
  %631 = vset.pattern.permute.xlu0 5
  %632 = vperm.xlu0 %631, %v31
  %v633 = vpop.permute.xlu0 %632
  %634 = vset.pattern.permute.xlu0 5
  %635 = vperm.xlu0 %634, %v32
  %v636 = vpop.permute.xlu0 %635
  %637 = vset.pattern.permute.xlu0 5
  %638 = vperm.xlu0 %637, %v33
  %v639 = vpop.permute.xlu0 %638
  %640 = vset.pattern.permute.xlu0 5
  %641 = vperm.xlu0 %640, %v34
  %v642 = vpop.permute.xlu0 %641
  %643 = vset.pattern.permute.xlu0 5
  %644 = vperm.xlu0 %643, %v35
  %v645 = vpop.permute.xlu0 %644
  %vm646 = vcmp.eq.s32.totalorder %v37, %v600
  %vm647 = vcmp.eq.s32.totalorder %v37, %v603
  %vm648 = vcmp.eq.s32.totalorder %v37, %v606
  %vm649 = vcmp.eq.s32.totalorder %v37, %v609
  %vm650 = vcmp.eq.s32.totalorder %v37, %v612
  %vm651 = vcmp.eq.s32.totalorder %v37, %v615
  %vm652 = vcmp.eq.s32.totalorder %v37, %v618
  %vm653 = vcmp.eq.s32.totalorder %v37, %v621
  %vm654 = vcmp.eq.s32.totalorder %v37, %v624
  %vm655 = vcmp.eq.s32.totalorder %v37, %v627
  %vm656 = vcmp.eq.s32.totalorder %v37, %v630
  %vm657 = vcmp.eq.s32.totalorder %v37, %v633
  %vm658 = vcmp.eq.s32.totalorder %v37, %v636
  %vm659 = vcmp.eq.s32.totalorder %v37, %v639
  %vm660 = vcmp.eq.s32.totalorder %v37, %v642
  %vm661 = vcmp.eq.s32.totalorder %v37, %v645
  %v662 = vsel %vm646, 1, 0
  %v663 = vsel %vm647, 1, 0
  %v664 = vsel %vm648, 1, 0
  %v665 = vsel %vm649, 1, 0
  %v666 = vsel %vm650, 1, 0
  %v667 = vsel %vm651, 1, 0
  %v668 = vsel %vm652, 1, 0
  %v669 = vsel %vm653, 1, 0
  %v670 = vsel %vm654, 1, 0
  %v671 = vsel %vm655, 1, 0
  %v672 = vsel %vm656, 1, 0
  %v673 = vsel %vm657, 1, 0
  %v674 = vsel %vm658, 1, 0
  %v675 = vsel %vm659, 1, 0
  %v676 = vsel %vm660, 1, 0
  %v677 = vsel %vm661, 1, 0
  %v678 = vcvt.s32.f32 %v662
  %v679 = vcvt.s32.f32 %v663
  %v680 = vcvt.s32.f32 %v664
  %v681 = vcvt.s32.f32 %v665
  %v682 = vcvt.s32.f32 %v666
  %v683 = vcvt.s32.f32 %v667
  %v684 = vcvt.s32.f32 %v668
  %v685 = vcvt.s32.f32 %v669
  %v686 = vcvt.s32.f32 %v670
  %v687 = vcvt.s32.f32 %v671
  %v688 = vcvt.s32.f32 %v672
  %v689 = vcvt.s32.f32 %v673
  %v690 = vcvt.s32.f32 %v674
  %v691 = vcvt.s32.f32 %v675
  %v692 = vcvt.s32.f32 %v676
  %v693 = vcvt.s32.f32 %v677
  %v694 = vadd.f32 %v582, %v678
  %v695 = vadd.f32 %v583, %v679
  %v696 = vadd.f32 %v584, %v680
  %v697 = vadd.f32 %v585, %v681
  %v698 = vadd.f32 %v586, %v682
  %v699 = vadd.f32 %v587, %v683
  %v700 = vadd.f32 %v588, %v684
  %v701 = vadd.f32 %v589, %v685
  %v702 = vadd.f32 %v590, %v686
  %v703 = vadd.f32 %v591, %v687
  %v704 = vadd.f32 %v592, %v688
  %v705 = vadd.f32 %v593, %v689
  %v706 = vadd.f32 %v594, %v690
  %v707 = vadd.f32 %v595, %v691
  %v708 = vadd.f32 %v596, %v692
  %v709 = vadd.f32 %v597, %v693
  %710 = vset.pattern.permute.xlu0 6
  %711 = vperm.xlu0 %710, %v20
  %v712 = vpop.permute.xlu0 %711
  %713 = vset.pattern.permute.xlu0 6
  %714 = vperm.xlu0 %713, %v21
  %v715 = vpop.permute.xlu0 %714
  %716 = vset.pattern.permute.xlu0 6
  %717 = vperm.xlu0 %716, %v22
  %v718 = vpop.permute.xlu0 %717
  %719 = vset.pattern.permute.xlu0 6
  %720 = vperm.xlu0 %719, %v23
  %v721 = vpop.permute.xlu0 %720
  %722 = vset.pattern.permute.xlu0 6
  %723 = vperm.xlu0 %722, %v24
  %v724 = vpop.permute.xlu0 %723
  %725 = vset.pattern.permute.xlu0 6
  %726 = vperm.xlu0 %725, %v25
  %v727 = vpop.permute.xlu0 %726
  %728 = vset.pattern.permute.xlu0 6
  %729 = vperm.xlu0 %728, %v26
  %v730 = vpop.permute.xlu0 %729
  %731 = vset.pattern.permute.xlu0 6
  %732 = vperm.xlu0 %731, %v27
  %v733 = vpop.permute.xlu0 %732
  %734 = vset.pattern.permute.xlu0 6
  %735 = vperm.xlu0 %734, %v28
  %v736 = vpop.permute.xlu0 %735
  %737 = vset.pattern.permute.xlu0 6
  %738 = vperm.xlu0 %737, %v29
  %v739 = vpop.permute.xlu0 %738
  %740 = vset.pattern.permute.xlu0 6
  %741 = vperm.xlu0 %740, %v30
  %v742 = vpop.permute.xlu0 %741
  %743 = vset.pattern.permute.xlu0 6
  %744 = vperm.xlu0 %743, %v31
  %v745 = vpop.permute.xlu0 %744
  %746 = vset.pattern.permute.xlu0 6
  %747 = vperm.xlu0 %746, %v32
  %v748 = vpop.permute.xlu0 %747
  %749 = vset.pattern.permute.xlu0 6
  %750 = vperm.xlu0 %749, %v33
  %v751 = vpop.permute.xlu0 %750
  %752 = vset.pattern.permute.xlu0 6
  %753 = vperm.xlu0 %752, %v34
  %v754 = vpop.permute.xlu0 %753
  %755 = vset.pattern.permute.xlu0 6
  %756 = vperm.xlu0 %755, %v35
  %v757 = vpop.permute.xlu0 %756
  %vm758 = vcmp.eq.s32.totalorder %v37, %v712
  %vm759 = vcmp.eq.s32.totalorder %v37, %v715
  %vm760 = vcmp.eq.s32.totalorder %v37, %v718
  %vm761 = vcmp.eq.s32.totalorder %v37, %v721
  %vm762 = vcmp.eq.s32.totalorder %v37, %v724
  %vm763 = vcmp.eq.s32.totalorder %v37, %v727
  %vm764 = vcmp.eq.s32.totalorder %v37, %v730
  %vm765 = vcmp.eq.s32.totalorder %v37, %v733
  %vm766 = vcmp.eq.s32.totalorder %v37, %v736
  %vm767 = vcmp.eq.s32.totalorder %v37, %v739
  %vm768 = vcmp.eq.s32.totalorder %v37, %v742
  %vm769 = vcmp.eq.s32.totalorder %v37, %v745
  %vm770 = vcmp.eq.s32.totalorder %v37, %v748
  %vm771 = vcmp.eq.s32.totalorder %v37, %v751
  %vm772 = vcmp.eq.s32.totalorder %v37, %v754
  %vm773 = vcmp.eq.s32.totalorder %v37, %v757
  %v774 = vsel %vm758, 1, 0
  %v775 = vsel %vm759, 1, 0
  %v776 = vsel %vm760, 1, 0
  %v777 = vsel %vm761, 1, 0
  %v778 = vsel %vm762, 1, 0
  %v779 = vsel %vm763, 1, 0
  %v780 = vsel %vm764, 1, 0
  %v781 = vsel %vm765, 1, 0
  %v782 = vsel %vm766, 1, 0
  %v783 = vsel %vm767, 1, 0
  %v784 = vsel %vm768, 1, 0
  %v785 = vsel %vm769, 1, 0
  %v786 = vsel %vm770, 1, 0
  %v787 = vsel %vm771, 1, 0
  %v788 = vsel %vm772, 1, 0
  %v789 = vsel %vm773, 1, 0
  %v790 = vcvt.s32.f32 %v774
  %v791 = vcvt.s32.f32 %v775
  %v792 = vcvt.s32.f32 %v776
  %v793 = vcvt.s32.f32 %v777
  %v794 = vcvt.s32.f32 %v778
  %v795 = vcvt.s32.f32 %v779
  %v796 = vcvt.s32.f32 %v780
  %v797 = vcvt.s32.f32 %v781
  %v798 = vcvt.s32.f32 %v782
  %v799 = vcvt.s32.f32 %v783
  %v800 = vcvt.s32.f32 %v784
  %v801 = vcvt.s32.f32 %v785
  %v802 = vcvt.s32.f32 %v786
  %v803 = vcvt.s32.f32 %v787
  %v804 = vcvt.s32.f32 %v788
  %v805 = vcvt.s32.f32 %v789
  %v806 = vadd.f32 %v694, %v790
  %v807 = vadd.f32 %v695, %v791
  %v808 = vadd.f32 %v696, %v792
  %v809 = vadd.f32 %v697, %v793
  %v810 = vadd.f32 %v698, %v794
  %v811 = vadd.f32 %v699, %v795
  %v812 = vadd.f32 %v700, %v796
  %v813 = vadd.f32 %v701, %v797
  %v814 = vadd.f32 %v702, %v798
  %v815 = vadd.f32 %v703, %v799
  %v816 = vadd.f32 %v704, %v800
  %v817 = vadd.f32 %v705, %v801
  %v818 = vadd.f32 %v706, %v802
  %v819 = vadd.f32 %v707, %v803
  %v820 = vadd.f32 %v708, %v804
  %v821 = vadd.f32 %v709, %v805
  %v822 = vld [vmem:[%s1] sm:$0xff]
  %v823 = vld [vmem:[%s1 + $0x8] sm:$0xff]
  %v824 = vld [vmem:[%s1 + $0x10] sm:$0xff]
  %v825 = vshra.s32 %v20, 7
  %v826 = vshra.s32 %v21, 7
  %v827 = vshra.s32 %v22, 7
  %v828 = vshra.s32 %v23, 7
  %v829 = vshra.s32 %v24, 7
  %v830 = vshra.s32 %v25, 7
  %v831 = vshra.s32 %v26, 7
  %v832 = vshra.s32 %v27, 7
  %v833 = vshra.s32 %v28, 7
  %v834 = vshra.s32 %v29, 7
  %v835 = vshra.s32 %v30, 7
  %v836 = vshra.s32 %v31, 7
  %v837 = vshra.s32 %v32, 7
  %v838 = vshra.s32 %v33, 7
  %v839 = vshra.s32 %v34, 7
  %v840 = vshra.s32 %v35, 7
  %v841 = vand.u32 %v20, 127
  %v842 = vand.u32 %v21, 127
  %v843 = vand.u32 %v22, 127
  %v844 = vand.u32 %v23, 127
  %v845 = vand.u32 %v24, 127
  %v846 = vand.u32 %v25, 127
  %v847 = vand.u32 %v26, 127
  %v848 = vand.u32 %v27, 127
  %v849 = vand.u32 %v28, 127
  %v850 = vand.u32 %v29, 127
  %v851 = vand.u32 %v30, 127
  %v852 = vand.u32 %v31, 127
  %v853 = vand.u32 %v32, 127
  %v854 = vand.u32 %v33, 127
  %v855 = vand.u32 %v34, 127
  %v856 = vand.u32 %v35, 127
  %v857 = vadd.s32 %v37, 128
  %858 = vset.pattern.permute.xlu0 7
  %859 = vperm.xlu0 %858, %v825
  %v860 = vpop.permute.xlu0 %859
  %861 = vset.pattern.permute.xlu0 7
  %862 = vperm.xlu0 %861, %v826
  %v863 = vpop.permute.xlu0 %862
  %864 = vset.pattern.permute.xlu0 7
  %865 = vperm.xlu0 %864, %v827
  %v866 = vpop.permute.xlu0 %865
  %867 = vset.pattern.permute.xlu0 7
  %868 = vperm.xlu0 %867, %v828
  %v869 = vpop.permute.xlu0 %868
  %870 = vset.pattern.permute.xlu0 7
  %871 = vperm.xlu0 %870, %v829
  %v872 = vpop.permute.xlu0 %871
  %873 = vset.pattern.permute.xlu0 7
  %874 = vperm.xlu0 %873, %v830
  %v875 = vpop.permute.xlu0 %874
  %876 = vset.pattern.permute.xlu0 7
  %877 = vperm.xlu0 %876, %v831
  %v878 = vpop.permute.xlu0 %877
  %879 = vset.pattern.permute.xlu0 7
  %880 = vperm.xlu0 %879, %v832
  %v881 = vpop.permute.xlu0 %880
  %882 = vset.pattern.permute.xlu0 7
  %883 = vperm.xlu0 %882, %v833
  %v884 = vpop.permute.xlu0 %883
  %885 = vset.pattern.permute.xlu0 7
  %886 = vperm.xlu0 %885, %v834
  %v887 = vpop.permute.xlu0 %886
  %888 = vset.pattern.permute.xlu0 7
  %889 = vperm.xlu0 %888, %v835
  %v890 = vpop.permute.xlu0 %889
  %891 = vset.pattern.permute.xlu0 7
  %892 = vperm.xlu0 %891, %v836
  %v893 = vpop.permute.xlu0 %892
  %894 = vset.pattern.permute.xlu0 7
  %895 = vperm.xlu0 %894, %v837
  %v896 = vpop.permute.xlu0 %895
  %897 = vset.pattern.permute.xlu0 7
  %898 = vperm.xlu0 %897, %v838
  %v899 = vpop.permute.xlu0 %898
  %900 = vset.pattern.permute.xlu0 7
  %901 = vperm.xlu0 %900, %v839
  %v902 = vpop.permute.xlu0 %901
  %903 = vset.pattern.permute.xlu0 7
  %904 = vperm.xlu0 %903, %v840
  %v905 = vpop.permute.xlu0 %904
  %vm906 = vcmp.eq.s32.totalorder %v37, %v860
  %vm907 = vcmp.eq.s32.totalorder %v857, %v860
  %vm908 = vcmp.eq.s32.totalorder %v37, %v863
  %vm909 = vcmp.eq.s32.totalorder %v857, %v863
  %vm910 = vcmp.eq.s32.totalorder %v37, %v866
  %vm911 = vcmp.eq.s32.totalorder %v857, %v866
  %vm912 = vcmp.eq.s32.totalorder %v37, %v869
  %vm913 = vcmp.eq.s32.totalorder %v857, %v869
  %vm914 = vcmp.eq.s32.totalorder %v37, %v872
  %vm915 = vcmp.eq.s32.totalorder %v857, %v872
  %vm916 = vcmp.eq.s32.totalorder %v37, %v875
  %vm917 = vcmp.eq.s32.totalorder %v857, %v875
  %vm918 = vcmp.eq.s32.totalorder %v37, %v878
  %vm919 = vcmp.eq.s32.totalorder %v857, %v878
  %vm920 = vcmp.eq.s32.totalorder %v37, %v881
  %vm921 = vcmp.eq.s32.totalorder %v857, %v881
  %vm922 = vcmp.eq.s32.totalorder %v37, %v884
  %vm923 = vcmp.eq.s32.totalorder %v857, %v884
  %vm924 = vcmp.eq.s32.totalorder %v37, %v887
  %vm925 = vcmp.eq.s32.totalorder %v857, %v887
  %vm926 = vcmp.eq.s32.totalorder %v37, %v890
  %vm927 = vcmp.eq.s32.totalorder %v857, %v890
  %vm928 = vcmp.eq.s32.totalorder %v37, %v893
  %vm929 = vcmp.eq.s32.totalorder %v857, %v893
  %vm930 = vcmp.eq.s32.totalorder %v37, %v896
  %vm931 = vcmp.eq.s32.totalorder %v857, %v896
  %vm932 = vcmp.eq.s32.totalorder %v37, %v899
  %vm933 = vcmp.eq.s32.totalorder %v857, %v899
  %vm934 = vcmp.eq.s32.totalorder %v37, %v902
  %vm935 = vcmp.eq.s32.totalorder %v857, %v902
  %vm936 = vcmp.eq.s32.totalorder %v37, %v905
  %vm937 = vcmp.eq.s32.totalorder %v857, %v905
  %v938 = vsel %vm906, 1, 0
  %v939 = vsel %vm907, 1, 0
  %v940 = vsel %vm908, 1, 0
  %v941 = vsel %vm909, 1, 0
  %v942 = vsel %vm910, 1, 0
  %v943 = vsel %vm911, 1, 0
  %v944 = vsel %vm912, 1, 0
  %v945 = vsel %vm913, 1, 0
  %v946 = vsel %vm914, 1, 0
  %v947 = vsel %vm915, 1, 0
  %v948 = vsel %vm916, 1, 0
  %v949 = vsel %vm917, 1, 0
  %v950 = vsel %vm918, 1, 0
  %v951 = vsel %vm919, 1, 0
  %v952 = vsel %vm920, 1, 0
  %v953 = vsel %vm921, 1, 0
  %v954 = vsel %vm922, 1, 0
  %v955 = vsel %vm923, 1, 0
  %v956 = vsel %vm924, 1, 0
  %v957 = vsel %vm925, 1, 0
  %v958 = vsel %vm926, 1, 0
  %v959 = vsel %vm927, 1, 0
  %v960 = vsel %vm928, 1, 0
  %v961 = vsel %vm929, 1, 0
  %v962 = vsel %vm930, 1, 0
  %v963 = vsel %vm931, 1, 0
  %v964 = vsel %vm932, 1, 0
  %v965 = vsel %vm933, 1, 0
  %v966 = vsel %vm934, 1, 0
  %v967 = vsel %vm935, 1, 0
  %v968 = vsel %vm936, 1, 0
  %v969 = vsel %vm937, 1, 0
  %v970 = vcvt.s32.f32 %v938
  %v971 = vcvt.s32.f32 %v939
  %v972 = vcvt.s32.f32 %v940
  %v973 = vcvt.s32.f32 %v941
  %v974 = vcvt.s32.f32 %v942
  %v975 = vcvt.s32.f32 %v943
  %v976 = vcvt.s32.f32 %v944
  %v977 = vcvt.s32.f32 %v945
  %v978 = vcvt.s32.f32 %v946
  %v979 = vcvt.s32.f32 %v947
  %v980 = vcvt.s32.f32 %v948
  %v981 = vcvt.s32.f32 %v949
  %v982 = vcvt.s32.f32 %v950
  %v983 = vcvt.s32.f32 %v951
  %v984 = vcvt.s32.f32 %v952
  %v985 = vcvt.s32.f32 %v953
  %v986 = vcvt.s32.f32 %v954
  %v987 = vcvt.s32.f32 %v955
  %v988 = vcvt.s32.f32 %v956
  %v989 = vcvt.s32.f32 %v957
  %v990 = vcvt.s32.f32 %v958
  %v991 = vcvt.s32.f32 %v959
  %v992 = vcvt.s32.f32 %v960
  %v993 = vcvt.s32.f32 %v961
  %v994 = vcvt.s32.f32 %v962
  %v995 = vcvt.s32.f32 %v963
  %v996 = vcvt.s32.f32 %v964
  %v997 = vcvt.s32.f32 %v965
  %v998 = vcvt.s32.f32 %v966
  %v999 = vcvt.s32.f32 %v967
  %v1000 = vcvt.s32.f32 %v968
  %v1001 = vcvt.s32.f32 %v969
  %v1002 = vld [vmem:[%s2] sm:$0xff]
  %v1003 = vld [vmem:[%s2 + $0x8] sm:$0xff]
  %v1004 = vld [vmem:[%s2 + $0x10] sm:$0xff]
  %v1005 = vld [vmem:[%s2 + $0x18] sm:$0xff]
  %v1006 = vld [vmem:[%s2 + $0x20] sm:$0xff]
  %v1007 = vld [vmem:[%s2 + $0x28] sm:$0xff]
  %v1008 = vld [vmem:[%s2 + $0x30] sm:$0xff]
  %v1009 = vld [vmem:[%s2 + $0x38] sm:$0xff]
  %v1010 = vld [vmem:[%s2 + $0x40] sm:$0xff]
  %v1011 = vld [vmem:[%s2 + $0x48] sm:$0xff]
  %v1012 = vld [vmem:[%s2 + $0x50] sm:$0xff]
  %v1013 = vld [vmem:[%s2 + $0x58] sm:$0xff]
  %v1014 = vld [vmem:[%s2 + $0x60] sm:$0xff]
  %v1015 = vld [vmem:[%s2 + $0x68] sm:$0xff]
  %v1016 = vld [vmem:[%s2 + $0x70] sm:$0xff]
  %v1017 = vld [vmem:[%s2 + $0x78] sm:$0xff]
  %v1018 = vld [vmem:[%s2 + $0x80] sm:$0xff]
  %v1019 = vld [vmem:[%s2 + $0x88] sm:$0xff]
  %v1020 = vld [vmem:[%s2 + $0x90] sm:$0xff]
  %v1021 = vld [vmem:[%s2 + $0x98] sm:$0xff]
  %v1022 = vld [vmem:[%s2 + $0xa0] sm:$0xff]
  %vm1023 = vcmask 326656
  %v1025 = vsel %vm1023, %v971, 0
  %v1028 = vsel %vm1023, %v973, 0
  %v1031 = vsel %vm1023, %v975, 0
  %v1034 = vsel %vm1023, %v977, 0
  %v1037 = vsel %vm1023, %v979, 0
  %v1040 = vsel %vm1023, %v981, 0
  %v1043 = vsel %vm1023, %v983, 0
  %v1046 = vsel %vm1023, %v985, 0
  %v1049 = vsel %vm1023, %v987, 0
  %v1052 = vsel %vm1023, %v989, 0
  %v1055 = vsel %vm1023, %v991, 0
  %v1058 = vsel %vm1023, %v993, 0
  %v1061 = vsel %vm1023, %v995, 0
  %v1064 = vsel %vm1023, %v997, 0
  %v1067 = vsel %vm1023, %v999, 0
  %v1070 = vsel %vm1023, %v1001, 0
  %1072 = vmatprep.subr.mxu0 0.0
  %1073 = vmatpush1.msra.mxu0 %v1017
  %1074 = vmatprep.subr.mxu0 0.0
  %1075 = vmatpush1.msra.mxu0 %v1016
  %1076 = vmatprep.subr.mxu0 0.0
  %1077 = vmatpush1.msra.mxu0 %v1015
  %1078 = vmatprep.subr.mxu0 0.0
  %1079 = vmatpush1.msra.mxu0 %v1014
  %1080 = vmatprep.subr.mxu0 0.0
  %1081 = vmatpush1.msra.mxu0 %v1013
  %1082 = vmatprep.subr.mxu0 0.0
  %1083 = vmatpush1.msra.mxu0 %v1012
  %1084 = vmatprep.subr.mxu0 0.0
  %1085 = vmatpush1.msra.mxu0 %v1011
  %1086 = vmatprep.subr.mxu0 0.0
  %1087 = vmatpush1.msra.mxu0 %v1010
  %1088 = vmatprep.subr.mxu0 0.0
  %1089 = vmatpush1.msra.mxu0 %v1009
  %1090 = vmatprep.subr.mxu0 0.0
  %1091 = vmatpush1.msra.mxu0 %v1008
  %1092 = vmatprep.subr.mxu0 0.0
  %1093 = vmatpush1.msra.mxu0 %v1007
  %1094 = vmatprep.subr.mxu0 0.0
  %1095 = vmatpush1.msra.mxu0 %v1006
  %1096 = vmatprep.subr.mxu0 0.0
  %1097 = vmatpush1.msra.mxu0 %v1005
  %1098 = vmatprep.subr.mxu0 0.0
  %1099 = vmatpush1.msra.mxu0 %v1004
  %1100 = vmatprep.subr.mxu0 0.0
  %1101 = vmatpush1.msra.mxu0 %v1003
  %1102 = vmatprep.subr.mxu0 0.0
  %1103 = vmatpush1.msra.mxu0 %v1002
  %1104 = vmatprep.subr.mxu0 0.0
  %1105 = vmatpush2.msra.mxu0 0.0
  %1106 = vmatprep.subr.mxu0 0.0
  %1107 = vmatpush2.msra.mxu0 0.0
  %1108 = vmatprep.subr.mxu0 0.0
  %1109 = vmatpush2.msra.mxu0 0.0
  %1110 = vmatprep.subr.mxu0 0.0
  %1111 = vmatpush2.msra.mxu0 0.0
  %1112 = vmatprep.subr.mxu0 0.0
  %1113 = vmatpush2.msra.mxu0 0.0
  %1114 = vmatprep.subr.mxu0 0.0
  %1115 = vmatpush2.msra.mxu0 0.0
  %1116 = vmatprep.subr.mxu0 0.0
  %1117 = vmatpush2.msra.mxu0 0.0
  %1118 = vmatprep.subr.mxu0 0.0
  %1119 = vmatpush2.msra.mxu0 0.0
  %1120 = vmatprep.subr.mxu0 0.0
  %1121 = vmatpush2.msra.mxu0 0.0
  %1122 = vmatprep.subr.mxu0 0.0
  %1123 = vmatpush2.msra.mxu0 0.0
  %1124 = vmatprep.subr.mxu0 0.0
  %1125 = vmatpush2.msra.mxu0 0.0
  %1126 = vmatprep.subr.mxu0 0.0
  %1127 = vmatpush2.msra.mxu0 %v1022
  %1128 = vmatprep.subr.mxu0 0.0
  %1129 = vmatpush2.msra.mxu0 %v1021
  %1130 = vmatprep.subr.mxu0 0.0
  %1131 = vmatpush2.msra.mxu0 %v1020
  %1132 = vmatprep.subr.mxu0 0.0
  %1133 = vmatpush2.msra.mxu0 %v1019
  %1134 = vmatprep.subr.mxu0 0.0
  %1135 = vmatpush2.msra.mxu0 %v1018
  %1136 = vmatprep.mubr.f32.mxu0 %v1025
  %1137 = vmatmul.mubr.f32.gmra.mxu0 %v970
  %v1138 = vpop.f32.mrf.mxu0
  %v1139 = vadd.f32 0.0, %v1138
  %v1140 = vpop.f32.mrf.mxu0
  %1141 = vmatprep.mubr.f32.mxu0 %v1028
  %1142 = vmatmul.mubr.f32.gmra.mxu0 %v972
  %v1143 = vpop.f32.mrf.mxu0
  %v1144 = vadd.f32 0.0, %v1143
  %v1145 = vpop.f32.mrf.mxu0
  %1146 = vmatprep.mubr.f32.mxu0 %v1031
  %1147 = vmatmul.mubr.f32.gmra.mxu0 %v974
  %v1148 = vpop.f32.mrf.mxu0
  %v1149 = vadd.f32 0.0, %v1148
  %v1150 = vpop.f32.mrf.mxu0
  %1151 = vmatprep.mubr.f32.mxu0 %v1034
  %1152 = vmatmul.mubr.f32.gmra.mxu0 %v976
  %v1153 = vpop.f32.mrf.mxu0
  %v1154 = vadd.f32 0.0, %v1153
  %v1155 = vpop.f32.mrf.mxu0
  %1156 = vmatprep.mubr.f32.mxu0 %v1037
  %1157 = vmatmul.mubr.f32.gmra.mxu0 %v978
  %v1158 = vpop.f32.mrf.mxu0
  %v1159 = vadd.f32 0.0, %v1158
  %v1160 = vpop.f32.mrf.mxu0
  %1161 = vmatprep.mubr.f32.mxu0 %v1040
  %1162 = vmatmul.mubr.f32.gmra.mxu0 %v980
  %v1163 = vpop.f32.mrf.mxu0
  %v1164 = vadd.f32 0.0, %v1163
  %v1165 = vpop.f32.mrf.mxu0
  %1166 = vmatprep.mubr.f32.mxu0 %v1043
  %1167 = vmatmul.mubr.f32.gmra.mxu0 %v982
  %v1168 = vpop.f32.mrf.mxu0
  %v1169 = vadd.f32 0.0, %v1168
  %v1170 = vpop.f32.mrf.mxu0
  %1171 = vmatprep.mubr.f32.mxu0 %v1046
  %1172 = vmatmul.mubr.f32.gmra.mxu0 %v984
  %v1173 = vpop.f32.mrf.mxu0
  %v1174 = vadd.f32 0.0, %v1173
  %v1175 = vpop.f32.mrf.mxu0
  %1176 = vmatprep.mubr.f32.mxu0 %v1049
  %1177 = vmatmul.mubr.f32.gmra.mxu0 %v986
  %v1178 = vpop.f32.mrf.mxu0
  %v1179 = vadd.f32 0.0, %v1178
  %v1180 = vpop.f32.mrf.mxu0
  %1181 = vmatprep.mubr.f32.mxu0 %v1052
  %1182 = vmatmul.mubr.f32.gmra.mxu0 %v988
  %v1183 = vpop.f32.mrf.mxu0
  %v1184 = vadd.f32 0.0, %v1183
  %v1185 = vpop.f32.mrf.mxu0
  %1186 = vmatprep.mubr.f32.mxu0 %v1055
  %1187 = vmatmul.mubr.f32.gmra.mxu0 %v990
  %v1188 = vpop.f32.mrf.mxu0
  %v1189 = vadd.f32 0.0, %v1188
  %v1190 = vpop.f32.mrf.mxu0
  %1191 = vmatprep.mubr.f32.mxu0 %v1058
  %1192 = vmatmul.mubr.f32.gmra.mxu0 %v992
  %v1193 = vpop.f32.mrf.mxu0
  %v1194 = vadd.f32 0.0, %v1193
  %v1195 = vpop.f32.mrf.mxu0
  %1196 = vmatprep.mubr.f32.mxu0 %v1061
  %1197 = vmatmul.mubr.f32.gmra.mxu0 %v994
  %v1198 = vpop.f32.mrf.mxu0
  %v1199 = vadd.f32 0.0, %v1198
  %v1200 = vpop.f32.mrf.mxu0
  %1201 = vmatprep.mubr.f32.mxu0 %v1064
  %1202 = vmatmul.mubr.f32.gmra.mxu0 %v996
  %v1203 = vpop.f32.mrf.mxu0
  %v1204 = vadd.f32 0.0, %v1203
  %v1205 = vpop.f32.mrf.mxu0
  %1206 = vmatprep.mubr.f32.mxu0 %v1067
  %1207 = vmatmul.mubr.f32.gmra.mxu0 %v998
  %v1208 = vpop.f32.mrf.mxu0
  %v1209 = vadd.f32 0.0, %v1208
  %v1210 = vpop.f32.mrf.mxu0
  %1211 = vmatprep.mubr.f32.mxu0 %v1070
  %1212 = vmatmul.mubr.f32.gmra.mxu0 %v1000
  %v1213 = vpop.f32.mrf.mxu0
  %v1214 = vadd.f32 0.0, %v1213
  %v1215 = vpop.f32.mrf.mxu0
  %1216 = vdwg.mxu0
  %1217 = vset.pattern.permute.xlu0 7
  %1218 = vperm.xlu0 %1217, %v841
  %v1219 = vpop.permute.xlu0 %1218
  %1220 = vset.pattern.permute.xlu0 7
  %1221 = vperm.xlu0 %1220, %v842
  %v1222 = vpop.permute.xlu0 %1221
  %1223 = vset.pattern.permute.xlu0 7
  %1224 = vperm.xlu0 %1223, %v843
  %v1225 = vpop.permute.xlu0 %1224
  %1226 = vset.pattern.permute.xlu0 7
  %1227 = vperm.xlu0 %1226, %v844
  %v1228 = vpop.permute.xlu0 %1227
  %1229 = vset.pattern.permute.xlu0 7
  %1230 = vperm.xlu0 %1229, %v845
  %v1231 = vpop.permute.xlu0 %1230
  %1232 = vset.pattern.permute.xlu0 7
  %1233 = vperm.xlu0 %1232, %v846
  %v1234 = vpop.permute.xlu0 %1233
  %1235 = vset.pattern.permute.xlu0 7
  %1236 = vperm.xlu0 %1235, %v847
  %v1237 = vpop.permute.xlu0 %1236
  %1238 = vset.pattern.permute.xlu0 7
  %1239 = vperm.xlu0 %1238, %v848
  %v1240 = vpop.permute.xlu0 %1239
  %1241 = vset.pattern.permute.xlu0 7
  %1242 = vperm.xlu0 %1241, %v849
  %v1243 = vpop.permute.xlu0 %1242
  %1244 = vset.pattern.permute.xlu0 7
  %1245 = vperm.xlu0 %1244, %v850
  %v1246 = vpop.permute.xlu0 %1245
  %1247 = vset.pattern.permute.xlu0 7
  %1248 = vperm.xlu0 %1247, %v851
  %v1249 = vpop.permute.xlu0 %1248
  %1250 = vset.pattern.permute.xlu0 7
  %1251 = vperm.xlu0 %1250, %v852
  %v1252 = vpop.permute.xlu0 %1251
  %1253 = vset.pattern.permute.xlu0 7
  %1254 = vperm.xlu0 %1253, %v853
  %v1255 = vpop.permute.xlu0 %1254
  %1256 = vset.pattern.permute.xlu0 7
  %1257 = vperm.xlu0 %1256, %v854
  %v1258 = vpop.permute.xlu0 %1257
  %1259 = vset.pattern.permute.xlu0 7
  %1260 = vperm.xlu0 %1259, %v855
  %v1261 = vpop.permute.xlu0 %1260
  %1262 = vset.pattern.permute.xlu0 7
  %1263 = vperm.xlu0 %1262, %v856
  %v1264 = vpop.permute.xlu0 %1263
  %vm1265 = vcmp.eq.s32.totalorder %v37, %v1219
  %vm1266 = vcmp.eq.s32.totalorder %v37, %v1222
  %vm1267 = vcmp.eq.s32.totalorder %v37, %v1225
  %vm1268 = vcmp.eq.s32.totalorder %v37, %v1228
  %vm1269 = vcmp.eq.s32.totalorder %v37, %v1231
  %vm1270 = vcmp.eq.s32.totalorder %v37, %v1234
  %vm1271 = vcmp.eq.s32.totalorder %v37, %v1237
  %vm1272 = vcmp.eq.s32.totalorder %v37, %v1240
  %vm1273 = vcmp.eq.s32.totalorder %v37, %v1243
  %vm1274 = vcmp.eq.s32.totalorder %v37, %v1246
  %vm1275 = vcmp.eq.s32.totalorder %v37, %v1249
  %vm1276 = vcmp.eq.s32.totalorder %v37, %v1252
  %vm1277 = vcmp.eq.s32.totalorder %v37, %v1255
  %vm1278 = vcmp.eq.s32.totalorder %v37, %v1258
  %vm1279 = vcmp.eq.s32.totalorder %v37, %v1261
  %vm1280 = vcmp.eq.s32.totalorder %v37, %v1264
  %v1281 = vsel %vm1265, 1, 0
  %v1282 = vsel %vm1266, 1, 0
  %v1283 = vsel %vm1267, 1, 0
  %v1284 = vsel %vm1268, 1, 0
  %v1285 = vsel %vm1269, 1, 0
  %v1286 = vsel %vm1270, 1, 0
  %v1287 = vsel %vm1271, 1, 0
  %v1288 = vsel %vm1272, 1, 0
  %v1289 = vsel %vm1273, 1, 0
  %v1290 = vsel %vm1274, 1, 0
  %v1291 = vsel %vm1275, 1, 0
  %v1292 = vsel %vm1276, 1, 0
  %v1293 = vsel %vm1277, 1, 0
  %v1294 = vsel %vm1278, 1, 0
  %v1295 = vsel %vm1279, 1, 0
  %v1296 = vsel %vm1280, 1, 0
  %v1297 = vcvt.s32.f32 %v1281
  %v1298 = vcvt.s32.f32 %v1282
  %v1299 = vcvt.s32.f32 %v1283
  %v1300 = vcvt.s32.f32 %v1284
  %v1301 = vcvt.s32.f32 %v1285
  %v1302 = vcvt.s32.f32 %v1286
  %v1303 = vcvt.s32.f32 %v1287
  %v1304 = vcvt.s32.f32 %v1288
  %v1305 = vcvt.s32.f32 %v1289
  %v1306 = vcvt.s32.f32 %v1290
  %v1307 = vcvt.s32.f32 %v1291
  %v1308 = vcvt.s32.f32 %v1292
  %v1309 = vcvt.s32.f32 %v1293
  %v1310 = vcvt.s32.f32 %v1294
  %v1311 = vcvt.s32.f32 %v1295
  %v1312 = vcvt.s32.f32 %v1296
  %v1313 = vmul.f32 %v1139, %v1297
  %v1314 = vmul.f32 %v1144, %v1298
  %v1315 = vmul.f32 %v1149, %v1299
  %v1316 = vmul.f32 %v1154, %v1300
  %v1317 = vmul.f32 %v1159, %v1301
  %v1318 = vmul.f32 %v1164, %v1302
  %v1319 = vmul.f32 %v1169, %v1303
  %v1320 = vmul.f32 %v1174, %v1304
  %v1321 = vmul.f32 %v1179, %v1305
  %v1322 = vmul.f32 %v1184, %v1306
  %v1323 = vmul.f32 %v1189, %v1307
  %v1324 = vmul.f32 %v1194, %v1308
  %v1325 = vmul.f32 %v1199, %v1309
  %v1326 = vmul.f32 %v1204, %v1310
  %v1327 = vmul.f32 %v1209, %v1311
  %v1328 = vmul.f32 %v1214, %v1312
  %1329 = vadd.xlane.f32.xlu0 %v1313
  %v1330 = vpop.xlane.xlu0 %1329
  %1331 = vadd.xlane.f32.xlu0 %v1314
  %v1332 = vpop.xlane.xlu0 %1331
  %1333 = vadd.xlane.f32.xlu0 %v1315
  %v1334 = vpop.xlane.xlu0 %1333
  %1335 = vadd.xlane.f32.xlu0 %v1316
  %v1336 = vpop.xlane.xlu0 %1335
  %1337 = vadd.xlane.f32.xlu0 %v1317
  %v1338 = vpop.xlane.xlu0 %1337
  %1339 = vadd.xlane.f32.xlu0 %v1318
  %v1340 = vpop.xlane.xlu0 %1339
  %1341 = vadd.xlane.f32.xlu0 %v1319
  %v1342 = vpop.xlane.xlu0 %1341
  %1343 = vadd.xlane.f32.xlu0 %v1320
  %v1344 = vpop.xlane.xlu0 %1343
  %1345 = vadd.xlane.f32.xlu0 %v1321
  %v1346 = vpop.xlane.xlu0 %1345
  %1347 = vadd.xlane.f32.xlu0 %v1322
  %v1348 = vpop.xlane.xlu0 %1347
  %1349 = vadd.xlane.f32.xlu0 %v1323
  %v1350 = vpop.xlane.xlu0 %1349
  %1351 = vadd.xlane.f32.xlu0 %v1324
  %v1352 = vpop.xlane.xlu0 %1351
  %1353 = vadd.xlane.f32.xlu0 %v1325
  %v1354 = vpop.xlane.xlu0 %1353
  %1355 = vadd.xlane.f32.xlu0 %v1326
  %v1356 = vpop.xlane.xlu0 %1355
  %1357 = vadd.xlane.f32.xlu0 %v1327
  %v1358 = vpop.xlane.xlu0 %1357
  %1359 = vadd.xlane.f32.xlu0 %v1328
  %v1360 = vpop.xlane.xlu0 %1359
  %v1361 = vld [vmem:[%s3] sm:$0x1]
  %v1363 = vlaneseq
  %v1364 = vshrl.u32 %v1363, 7
  %v1365 = vsub.s32 0, %v1364
  %v1366 = vrot.slane %v1361, %v1365
  %v1368 = vmul.f32 %v1330, %v1366
  %v1369 = vmul.f32 %v1332, %v1366
  %v1370 = vmul.f32 %v1334, %v1366
  %v1371 = vmul.f32 %v1336, %v1366
  %v1372 = vmul.f32 %v1338, %v1366
  %v1373 = vmul.f32 %v1340, %v1366
  %v1374 = vmul.f32 %v1342, %v1366
  %v1375 = vmul.f32 %v1344, %v1366
  %v1376 = vmul.f32 %v1346, %v1366
  %v1377 = vmul.f32 %v1348, %v1366
  %v1378 = vmul.f32 %v1350, %v1366
  %v1379 = vmul.f32 %v1352, %v1366
  %v1380 = vmul.f32 %v1354, %v1366
  %v1381 = vmul.f32 %v1356, %v1366
  %v1382 = vmul.f32 %v1358, %v1366
  %v1383 = vmul.f32 %v1360, %v1366
  %vm1384 = vcmask 195584
  %v1386 = vsel %vm1384, %v806, 0
  %v1389 = vsel %vm1384, %v807, 0
  %v1392 = vsel %vm1384, %v808, 0
  %v1395 = vsel %vm1384, %v809, 0
  %v1398 = vsel %vm1384, %v810, 0
  %v1401 = vsel %vm1384, %v811, 0
  %v1404 = vsel %vm1384, %v812, 0
  %v1407 = vsel %vm1384, %v813, 0
  %v1410 = vsel %vm1384, %v814, 0
  %v1413 = vsel %vm1384, %v815, 0
  %v1416 = vsel %vm1384, %v816, 0
  %v1419 = vsel %vm1384, %v817, 0
  %v1422 = vsel %vm1384, %v818, 0
  %v1425 = vsel %vm1384, %v819, 0
  %v1428 = vsel %vm1384, %v820, 0
  %v1431 = vsel %vm1384, %v821, 0
  %1433 = vmatprep.subr.mxu0 0.0
  %1434 = vmatpush1.msra.mxu0 0.0
  %1435 = vmatprep.subr.mxu0 0.0
  %1436 = vmatpush1.msra.mxu0 0.0
  %1437 = vmatprep.subr.mxu0 0.0
  %1438 = vmatpush1.msra.mxu0 0.0
  %1439 = vmatprep.subr.mxu0 0.0
  %1440 = vmatpush1.msra.mxu0 0.0
  %1441 = vmatprep.subr.mxu0 0.0
  %1442 = vmatpush1.msra.mxu0 0.0
  %1443 = vmatprep.subr.mxu0 0.0
  %1444 = vmatpush1.msra.mxu0 0.0
  %1445 = vmatprep.subr.mxu0 0.0
  %1446 = vmatpush1.msra.mxu0 0.0
  %1447 = vmatprep.subr.mxu0 0.0
  %1448 = vmatpush1.msra.mxu0 0.0
  %1449 = vmatprep.subr.mxu0 0.0
  %1450 = vmatpush1.msra.mxu0 0.0
  %1451 = vmatprep.subr.mxu0 0.0
  %1452 = vmatpush1.msra.mxu0 0.0
  %1453 = vmatprep.subr.mxu0 0.0
  %1454 = vmatpush1.msra.mxu0 0.0
  %1455 = vmatprep.subr.mxu0 0.0
  %1456 = vmatpush1.msra.mxu0 0.0
  %1457 = vmatprep.subr.mxu0 0.0
  %1458 = vmatpush1.msra.mxu0 0.0
  %1459 = vmatprep.subr.mxu0 0.0
  %1460 = vmatpush1.msra.mxu0 %v824
  %1461 = vmatprep.subr.mxu0 0.0
  %1462 = vmatpush1.msra.mxu0 %v823
  %1463 = vmatprep.subr.mxu0 0.0
  %1464 = vmatpush1.msra.mxu0 %v822
  %1465 = vmatprep.subr.mxu0 0.0
  %1466 = vmatpush2.msra.mxu0 0.0
  %1467 = vmatprep.subr.mxu0 0.0
  %1468 = vmatpush2.msra.mxu0 0.0
  %1469 = vmatprep.subr.mxu0 0.0
  %1470 = vmatpush2.msra.mxu0 0.0
  %1471 = vmatprep.subr.mxu0 0.0
  %1472 = vmatpush2.msra.mxu0 0.0
  %1473 = vmatprep.subr.mxu0 0.0
  %1474 = vmatpush2.msra.mxu0 0.0
  %1475 = vmatprep.subr.mxu0 0.0
  %1476 = vmatpush2.msra.mxu0 0.0
  %1477 = vmatprep.subr.mxu0 0.0
  %1478 = vmatpush2.msra.mxu0 0.0
  %1479 = vmatprep.subr.mxu0 0.0
  %1480 = vmatpush2.msra.mxu0 0.0
  %1481 = vmatprep.subr.mxu0 0.0
  %1482 = vmatpush2.msra.mxu0 0.0
  %1483 = vmatprep.subr.mxu0 0.0
  %1484 = vmatpush2.msra.mxu0 0.0
  %1485 = vmatprep.subr.mxu0 0.0
  %1486 = vmatpush2.msra.mxu0 0.0
  %1487 = vmatprep.subr.mxu0 0.0
  %1488 = vmatpush2.msra.mxu0 0.0
  %1489 = vmatprep.subr.mxu0 0.0
  %1490 = vmatpush2.msra.mxu0 0.0
  %1491 = vmatprep.subr.mxu0 0.0
  %1492 = vmatpush2.msra.mxu0 0.0
  %1493 = vmatprep.subr.mxu0 0.0
  %1494 = vmatpush2.msra.mxu0 0.0
  %1495 = vmatprep.subr.mxu0 0.0
  %1496 = vmatpush2.msra.mxu0 0.0
  %1497 = vmatprep.mubr.f32.mxu0 0.0
  %1498 = vmatmul.mubr.f32.gmra.mxu0 %v1386
  %v1499 = vpop.f32.mrf.mxu0
  %v1500 = vadd.f32 %v1368, %v1499
  %v1501 = vpop.f32.mrf.mxu0
  %1502 = vmatprep.mubr.f32.mxu0 0.0
  %1503 = vmatmul.mubr.f32.gmra.mxu0 %v1389
  %v1504 = vpop.f32.mrf.mxu0
  %v1505 = vadd.f32 %v1369, %v1504
  %v1506 = vpop.f32.mrf.mxu0
  %1507 = vmatprep.mubr.f32.mxu0 0.0
  %1508 = vmatmul.mubr.f32.gmra.mxu0 %v1392
  %v1509 = vpop.f32.mrf.mxu0
  %v1510 = vadd.f32 %v1370, %v1509
  %v1511 = vpop.f32.mrf.mxu0
  %1512 = vmatprep.mubr.f32.mxu0 0.0
  %1513 = vmatmul.mubr.f32.gmra.mxu0 %v1395
  %v1514 = vpop.f32.mrf.mxu0
  %v1515 = vadd.f32 %v1371, %v1514
  %v1516 = vpop.f32.mrf.mxu0
  %1517 = vmatprep.mubr.f32.mxu0 0.0
  %1518 = vmatmul.mubr.f32.gmra.mxu0 %v1398
  %v1519 = vpop.f32.mrf.mxu0
  %v1520 = vadd.f32 %v1372, %v1519
  %v1521 = vpop.f32.mrf.mxu0
  %1522 = vmatprep.mubr.f32.mxu0 0.0
  %1523 = vmatmul.mubr.f32.gmra.mxu0 %v1401
  %v1524 = vpop.f32.mrf.mxu0
  %v1525 = vadd.f32 %v1373, %v1524
  %v1526 = vpop.f32.mrf.mxu0
  %1527 = vmatprep.mubr.f32.mxu0 0.0
  %1528 = vmatmul.mubr.f32.gmra.mxu0 %v1404
  %v1529 = vpop.f32.mrf.mxu0
  %v1530 = vadd.f32 %v1374, %v1529
  %v1531 = vpop.f32.mrf.mxu0
  %1532 = vmatprep.mubr.f32.mxu0 0.0
  %1533 = vmatmul.mubr.f32.gmra.mxu0 %v1407
  %v1534 = vpop.f32.mrf.mxu0
  %v1535 = vadd.f32 %v1375, %v1534
  %v1536 = vpop.f32.mrf.mxu0
  %1537 = vmatprep.mubr.f32.mxu0 0.0
  %1538 = vmatmul.mubr.f32.gmra.mxu0 %v1410
  %v1539 = vpop.f32.mrf.mxu0
  %v1540 = vadd.f32 %v1376, %v1539
  %v1541 = vpop.f32.mrf.mxu0
  %1542 = vmatprep.mubr.f32.mxu0 0.0
  %1543 = vmatmul.mubr.f32.gmra.mxu0 %v1413
  %v1544 = vpop.f32.mrf.mxu0
  %v1545 = vadd.f32 %v1377, %v1544
  %v1546 = vpop.f32.mrf.mxu0
  %1547 = vmatprep.mubr.f32.mxu0 0.0
  %1548 = vmatmul.mubr.f32.gmra.mxu0 %v1416
  %v1549 = vpop.f32.mrf.mxu0
  %v1550 = vadd.f32 %v1378, %v1549
  %v1551 = vpop.f32.mrf.mxu0
  %1552 = vmatprep.mubr.f32.mxu0 0.0
  %1553 = vmatmul.mubr.f32.gmra.mxu0 %v1419
  %v1554 = vpop.f32.mrf.mxu0
  %v1555 = vadd.f32 %v1379, %v1554
  %v1556 = vpop.f32.mrf.mxu0
  %1557 = vmatprep.mubr.f32.mxu0 0.0
  %1558 = vmatmul.mubr.f32.gmra.mxu0 %v1422
  %v1559 = vpop.f32.mrf.mxu0
  %v1560 = vadd.f32 %v1380, %v1559
  %v1561 = vpop.f32.mrf.mxu0
  %1562 = vmatprep.mubr.f32.mxu0 0.0
  %1563 = vmatmul.mubr.f32.gmra.mxu0 %v1425
  %v1564 = vpop.f32.mrf.mxu0
  %v1565 = vadd.f32 %v1381, %v1564
  %v1566 = vpop.f32.mrf.mxu0
  %1567 = vmatprep.mubr.f32.mxu0 0.0
  %1568 = vmatmul.mubr.f32.gmra.mxu0 %v1428
  %v1569 = vpop.f32.mrf.mxu0
  %v1570 = vadd.f32 %v1382, %v1569
  %v1571 = vpop.f32.mrf.mxu0
  %1572 = vmatprep.mubr.f32.mxu0 0.0
  %1573 = vmatmul.mubr.f32.gmra.mxu0 %v1431
  %v1574 = vpop.f32.mrf.mxu0
  %v1575 = vadd.f32 %v1383, %v1574
  %v1576 = vpop.f32.mrf.mxu0
  %1577 = vdwg.mxu0
  %v1578 = vld [vmem:[%s4] sm:$0x1]
  %v1580 = vlaneseq
  %v1581 = vshrl.u32 %v1580, 7
  %v1582 = vsub.s32 0, %v1581
  %v1583 = vrot.slane %v1578, %v1582
  %v1585 = vadd.f32 %v1500, %v1583
  %v1586 = vadd.f32 %v1505, %v1583
  %v1587 = vadd.f32 %v1510, %v1583
  %v1588 = vadd.f32 %v1515, %v1583
  %v1589 = vadd.f32 %v1520, %v1583
  %v1590 = vadd.f32 %v1525, %v1583
  %v1591 = vadd.f32 %v1530, %v1583
  %v1592 = vadd.f32 %v1535, %v1583
  %v1593 = vadd.f32 %v1540, %v1583
  %v1594 = vadd.f32 %v1545, %v1583
  %v1595 = vadd.f32 %v1550, %v1583
  %v1596 = vadd.f32 %v1555, %v1583
  %v1597 = vadd.f32 %v1560, %v1583
  %v1598 = vadd.f32 %v1565, %v1583
  %v1599 = vadd.f32 %v1570, %v1583
  %v1600 = vadd.f32 %v1575, %v1583
  %1601 = vmax.xlane.f32.xlu0 %v1585
  %v1602 = vpop.xlane.xlu0 %1601
  %1603 = vmax.xlane.f32.xlu0 %v1586
  %v1604 = vpop.xlane.xlu0 %1603
  %1605 = vmax.xlane.f32.xlu0 %v1587
  %v1606 = vpop.xlane.xlu0 %1605
  %1607 = vmax.xlane.f32.xlu0 %v1588
  %v1608 = vpop.xlane.xlu0 %1607
  %1609 = vmax.xlane.f32.xlu0 %v1589
  %v1610 = vpop.xlane.xlu0 %1609
  %1611 = vmax.xlane.f32.xlu0 %v1590
  %v1612 = vpop.xlane.xlu0 %1611
  %1613 = vmax.xlane.f32.xlu0 %v1591
  %v1614 = vpop.xlane.xlu0 %1613
  %1615 = vmax.xlane.f32.xlu0 %v1592
  %v1616 = vpop.xlane.xlu0 %1615
  %1617 = vmax.xlane.f32.xlu0 %v1593
  %v1618 = vpop.xlane.xlu0 %1617
  %1619 = vmax.xlane.f32.xlu0 %v1594
  %v1620 = vpop.xlane.xlu0 %1619
  %1621 = vmax.xlane.f32.xlu0 %v1595
  %v1622 = vpop.xlane.xlu0 %1621
  %1623 = vmax.xlane.f32.xlu0 %v1596
  %v1624 = vpop.xlane.xlu0 %1623
  %1625 = vmax.xlane.f32.xlu0 %v1597
  %v1626 = vpop.xlane.xlu0 %1625
  %1627 = vmax.xlane.f32.xlu0 %v1598
  %v1628 = vpop.xlane.xlu0 %1627
  %1629 = vmax.xlane.f32.xlu0 %v1599
  %v1630 = vpop.xlane.xlu0 %1629
  %1631 = vmax.xlane.f32.xlu0 %v1600
  %v1632 = vpop.xlane.xlu0 %1631
  %v1633 = vsub.f32 %v1585, %v1602
  %v1634 = vsub.f32 %v1586, %v1604
  %v1635 = vsub.f32 %v1587, %v1606
  %v1636 = vsub.f32 %v1588, %v1608
  %v1637 = vsub.f32 %v1589, %v1610
  %v1638 = vsub.f32 %v1590, %v1612
  %v1639 = vsub.f32 %v1591, %v1614
  %v1640 = vsub.f32 %v1592, %v1616
  %v1641 = vsub.f32 %v1593, %v1618
  %v1642 = vsub.f32 %v1594, %v1620
  %v1643 = vsub.f32 %v1595, %v1622
  %v1644 = vsub.f32 %v1596, %v1624
  %v1645 = vsub.f32 %v1597, %v1626
  %v1646 = vsub.f32 %v1598, %v1628
  %v1647 = vsub.f32 %v1599, %v1630
  %v1648 = vsub.f32 %v1600, %v1632
  %v1649 = vmul.f32 %v1633, 1.442695
  %v1650 = vpow.pop %v1649
  %v1651 = vmul.f32 %v1634, 1.442695
  %v1652 = vpow.pop %v1651
  %v1653 = vmul.f32 %v1635, 1.442695
  %v1654 = vpow.pop %v1653
  %v1655 = vmul.f32 %v1636, 1.442695
  %v1656 = vpow.pop %v1655
  %v1657 = vmul.f32 %v1637, 1.442695
  %v1658 = vpow.pop %v1657
  %v1659 = vmul.f32 %v1638, 1.442695
  %v1660 = vpow.pop %v1659
  %v1661 = vmul.f32 %v1639, 1.442695
  %v1662 = vpow.pop %v1661
  %v1663 = vmul.f32 %v1640, 1.442695
  %v1664 = vpow.pop %v1663
  %v1665 = vmul.f32 %v1641, 1.442695
  %v1666 = vpow.pop %v1665
  %v1667 = vmul.f32 %v1642, 1.442695
  %v1668 = vpow.pop %v1667
  %v1669 = vmul.f32 %v1643, 1.442695
  %v1670 = vpow.pop %v1669
  %v1671 = vmul.f32 %v1644, 1.442695
  %v1672 = vpow.pop %v1671
  %v1673 = vmul.f32 %v1645, 1.442695
  %v1674 = vpow.pop %v1673
  %v1675 = vmul.f32 %v1646, 1.442695
  %v1676 = vpow.pop %v1675
  %v1677 = vmul.f32 %v1647, 1.442695
  %v1678 = vpow.pop %v1677
  %v1679 = vmul.f32 %v1648, 1.442695
  %v1680 = vpow.pop %v1679
  %1681 = vadd.xlane.f32.xlu0 %v1650
  %v1682 = vpop.xlane.xlu0 %1681
  %1683 = vadd.xlane.f32.xlu0 %v1652
  %v1684 = vpop.xlane.xlu0 %1683
  %1685 = vadd.xlane.f32.xlu0 %v1654
  %v1686 = vpop.xlane.xlu0 %1685
  %1687 = vadd.xlane.f32.xlu0 %v1656
  %v1688 = vpop.xlane.xlu0 %1687
  %1689 = vadd.xlane.f32.xlu0 %v1658
  %v1690 = vpop.xlane.xlu0 %1689
  %1691 = vadd.xlane.f32.xlu0 %v1660
  %v1692 = vpop.xlane.xlu0 %1691
  %1693 = vadd.xlane.f32.xlu0 %v1662
  %v1694 = vpop.xlane.xlu0 %1693
  %1695 = vadd.xlane.f32.xlu0 %v1664
  %v1696 = vpop.xlane.xlu0 %1695
  %1697 = vadd.xlane.f32.xlu0 %v1666
  %v1698 = vpop.xlane.xlu0 %1697
  %1699 = vadd.xlane.f32.xlu0 %v1668
  %v1700 = vpop.xlane.xlu0 %1699
  %1701 = vadd.xlane.f32.xlu0 %v1670
  %v1702 = vpop.xlane.xlu0 %1701
  %1703 = vadd.xlane.f32.xlu0 %v1672
  %v1704 = vpop.xlane.xlu0 %1703
  %1705 = vadd.xlane.f32.xlu0 %v1674
  %v1706 = vpop.xlane.xlu0 %1705
  %1707 = vadd.xlane.f32.xlu0 %v1676
  %v1708 = vpop.xlane.xlu0 %1707
  %1709 = vadd.xlane.f32.xlu0 %v1678
  %v1710 = vpop.xlane.xlu0 %1709
  %1711 = vadd.xlane.f32.xlu0 %v1680
  %v1712 = vpop.xlane.xlu0 %1711
  %v1713 = vrcp.pop %v1682
  %v1714 = vmul.f32 %v1650, %v1713
  %v1715 = vrcp.pop %v1684
  %v1716 = vmul.f32 %v1652, %v1715
  %v1717 = vrcp.pop %v1686
  %v1718 = vmul.f32 %v1654, %v1717
  %v1719 = vrcp.pop %v1688
  %v1720 = vmul.f32 %v1656, %v1719
  %v1721 = vrcp.pop %v1690
  %v1722 = vmul.f32 %v1658, %v1721
  %v1723 = vrcp.pop %v1692
  %v1724 = vmul.f32 %v1660, %v1723
  %v1725 = vrcp.pop %v1694
  %v1726 = vmul.f32 %v1662, %v1725
  %v1727 = vrcp.pop %v1696
  %v1728 = vmul.f32 %v1664, %v1727
  %v1729 = vrcp.pop %v1698
  %v1730 = vmul.f32 %v1666, %v1729
  %v1731 = vrcp.pop %v1700
  %v1732 = vmul.f32 %v1668, %v1731
  %v1733 = vrcp.pop %v1702
  %v1734 = vmul.f32 %v1670, %v1733
  %v1735 = vrcp.pop %v1704
  %v1736 = vmul.f32 %v1672, %v1735
  %v1737 = vrcp.pop %v1706
  %v1738 = vmul.f32 %v1674, %v1737
  %v1739 = vrcp.pop %v1708
  %v1740 = vmul.f32 %v1676, %v1739
  %v1741 = vrcp.pop %v1710
  %v1742 = vmul.f32 %v1678, %v1741
  %v1743 = vrcp.pop %v1712
  %v1744 = vmul.f32 %v1680, %v1743
  %1745 = vst [vmem:[%s5] sm:$0xff] %v1714
  %1746 = vst [vmem:[%s5 + $0x8] sm:$0xff] %v1716
  %1747 = vst [vmem:[%s5 + $0x10] sm:$0xff] %v1718
  %1748 = vst [vmem:[%s5 + $0x18] sm:$0xff] %v1720
  %1749 = vst [vmem:[%s5 + $0x20] sm:$0xff] %v1722
  %1750 = vst [vmem:[%s5 + $0x28] sm:$0xff] %v1724
  %1751 = vst [vmem:[%s5 + $0x30] sm:$0xff] %v1726
  %1752 = vst [vmem:[%s5 + $0x38] sm:$0xff] %v1728
  %1753 = vst [vmem:[%s5 + $0x40] sm:$0xff] %v1730
  %1754 = vst [vmem:[%s5 + $0x48] sm:$0xff] %v1732
  %1755 = vst [vmem:[%s5 + $0x50] sm:$0xff] %v1734
  %1756 = vst [vmem:[%s5 + $0x58] sm:$0xff] %v1736
  %1757 = vst [vmem:[%s5 + $0x60] sm:$0xff] %v1738
  %1758 = vst [vmem:[%s5 + $0x68] sm:$0xff] %v1740
  %1759 = vst [vmem:[%s5 + $0x70] sm:$0xff] %v1742
  %1760 = vst [vmem:[%s5 + $0x78] sm:$0xff] %v1744
  // Predicated region
  $region22: #{classification_forward_batched.1} parent=0 // pred_check
    _
  $region23: #{classification_forward_batched.1} parent=0 // pred_check_branch
    %1762 = sbr.rel (0) target = $region25
  $region24: #{classification_forward_batched.1} parent=0 // pred_region
    _
  $region25: #{classification_forward_batched.1} parent=0 // pred_fallthru
    _
  // Predicated region
  $region26: #{classification_forward_batched.1} parent=0 // pred_check
    _
  $region27: #{classification_forward_batched.1} parent=0 // pred_check_branch
    %1764 = sbr.rel (0) target = $region29
  $region28: #{classification_forward_batched.1} parent=0 // pred_region
    _
  $region29: #{classification_forward_batched.1} parent=0 // pred_fallthru
    _

</llo_original>
